<compile_context>
chip_gen: v5e
topology: v5e:2x2
jax: 0.10.0
libtpu: 0.0.40
codegen_flags: <defaults>
</compile_context>

<pallas_src>
import jax
import jax.numpy as jnp
from jax.experimental import pallas as pl
from jax.experimental.pallas import tpu as pltpu

D_IN = 16 + 3        # 19
D_IN_PAD = 128       # zero-padded feature width (one full lane group)
D_HID = 256


def _round_up(x, m):
    return (x + m - 1) // m * m


def _silu(x):
    # x * sigmoid(x); approx reciprocal keeps this on the EUP slot.
    return x * pl.reciprocal(1.0 + jnp.exp(-x), approx=True)


def shading_kernel(x_ref, w1_ref, b1_ref, w2_ref, b2_ref, w3_ref, b3_ref, o_ref):
    # layer1: Linear(19->256, zero-padded K) + SiLU   (bf16 in, f32 acc)
    h = jnp.dot(x_ref[...], w1_ref[...],
                preferred_element_type=jnp.float32) + b1_ref[...]
    h = _silu(h).astype(jnp.bfloat16)
    # layer2: Linear(256, 256) + SiLU
    h = jnp.dot(h, w2_ref[...],
                preferred_element_type=jnp.float32) + b2_ref[...]
    h = _silu(h).astype(jnp.bfloat16)
    # layer3: Linear(256, 256) + SiLU
    h = jnp.dot(h, w3_ref[...],
                preferred_element_type=jnp.float32) + b3_ref[...]
    h = _silu(h)
    # out: ReLU
    o_ref[...] = jnp.maximum(h, 0.0).astype(o_ref.dtype)


def shading_forward(normal, l, params, *, tile_n=1024, out_dtype=jnp.float32):
    w1, b1, w2, b2, w3, b3 = params

    # glue: torch.cat((l, normal), dim=0)
    x = jnp.concatenate([l, normal], axis=0)
    N, D = x.shape
    assert D == D_IN

    # Pad feature axis 19 -> 128 (zeros contribute nothing through w1-padding),
    # cast MXU operands to bf16 once, outside the kernel.
    x = jnp.pad(x, ((0, 0), (0, D_IN_PAD - D_IN))).astype(jnp.bfloat16)
    w1p = jnp.pad(w1, ((0, D_IN_PAD - D_IN), (0, 0))).astype(jnp.bfloat16)
    w2b = w2.astype(jnp.bfloat16)
    w3b = w3.astype(jnp.bfloat16)
    b1f = b1.astype(jnp.float32)
    b2f = b2.astype(jnp.float32)
    b3f = b3.astype(jnp.float32)

    # Row tiling: big tiles keep the MXU M-dimension full; adapt for small N.
    tile = min(tile_n, _round_up(N, 8))
    Np = _round_up(N, tile)
    if Np != N:
        x = jnp.pad(x, ((0, Np - N), (0, 0)))

    grid = (Np // tile,)
    const = lambda i: (0, 0)   # weights/biases are grid-invariant (stay resident)

    out = pl.pallas_call(
        shading_kernel,
        out_shape=jax.ShapeDtypeStruct((Np, D_HID), out_dtype),
        grid_spec=pltpu.PrefetchScalarGridSpec(
            num_scalar_prefetch=0,
            grid=grid,
            in_specs=[
                pl.BlockSpec((tile, D_IN_PAD), lambda i: (i, 0)),
                pl.BlockSpec((D_IN_PAD, D_HID), const),
                pl.BlockSpec((1, D_HID), const),
                pl.BlockSpec((D_HID, D_HID), const),
                pl.BlockSpec((1, D_HID), const),
                pl.BlockSpec((D_HID, D_HID), const),
                pl.BlockSpec((1, D_HID), const),
            ],
            out_specs=pl.BlockSpec((tile, D_HID), lambda i: (i, 0)),
        ),
        compiler_params=pltpu.CompilerParams(
            dimension_semantics=("parallel",),
            vmem_limit_bytes=48 * 1024 * 1024),
    )(x, w1p, b1f, w2b, b2f, w3b, b3f)

    return out[:N]


def make_params(key):
    # Deterministic synthetic parameters, already in (in, out) layout.
    k1, k2, k3, k4, k5, k6 = jax.random.split(key, 6)
    w1 = jax.random.normal(k1, (D_IN, D_HID), jnp.float32) * (1.0 / jnp.sqrt(D_IN))
    b1 = jax.random.normal(k2, (1, D_HID), jnp.float32) * 0.01
    w2 = jax.random.normal(k3, (D_HID, D_HID), jnp.float32) * (1.0 / jnp.sqrt(D_HID))
    b2 = jax.random.normal(k4, (1, D_HID), jnp.float32) * 0.01
    w3 = jax.random.normal(k5, (D_HID, D_HID), jnp.float32) * (1.0 / jnp.sqrt(D_HID))
    b3 = jax.random.normal(k6, (1, D_HID), jnp.float32) * 0.01
    return (w1, b1, w2, b2, w3, b3)


def shading_reference(normal, l, params):
    # Reference mirroring the kernel's matmul numerics (bf16 MXU inputs,
    # f32 accumulation) with exact sigmoid.
    w1, b1, w2, b2, w3, b3 = params

    def dot(a, w):
        return jnp.dot(a.astype(jnp.bfloat16), w.astype(jnp.bfloat16),
                       preferred_element_type=jnp.float32)

    def silu(x):
        return x * jax.nn.sigmoid(x)

    x = jnp.concatenate([l, normal], axis=0)
    h = silu(dot(x, w1) + b1)
    h = silu(dot(h, w2) + b2)
    h = silu(dot(h, w3) + b3)
    return jnp.maximum(h, 0.0)


if __name__ == "__main__":
    key = jax.random.PRNGKey(0)
    kp, kn, kl = jax.random.split(key, 3)
    params = make_params(kp)

    # small shapes consistent with the forward: last dim = 16 + 3 = 19
    normal = jax.random.normal(kn, (64, D_IN), jnp.float32)
    l = jax.random.normal(kl, (64, D_IN), jnp.float32)

    out = shading_forward(normal, l, params)
    out = jax.block_until_ready(out)

    ref = shading_reference(normal, l, params)
    assert out.shape == (128, D_HID)
    assert jnp.all(jnp.isfinite(out))
    # approx-reciprocal SiLU + bf16 matmul inputs => modest tolerance
    assert jnp.allclose(out, ref, atol=2e-2, rtol=2e-2), "mismatch vs JAX reference"
    print("KERNEL_OK")
</pallas_src>

<mosaic_0001>
module attributes {stable_mosaic.version = 11 : i64} {
  func.func @shading_kernel(%arg0: i32, %arg1: memref<128x128xbf16, #tpu.memory_space<vmem>>, %arg2: memref<128x256xbf16, #tpu.memory_space<vmem>>, %arg3: memref<1x256xf32, #tpu.memory_space<vmem>>, %arg4: memref<256x256xbf16, #tpu.memory_space<vmem>>, %arg5: memref<1x256xf32, #tpu.memory_space<vmem>>, %arg6: memref<256x256xbf16, #tpu.memory_space<vmem>>, %arg7: memref<1x256xf32, #tpu.memory_space<vmem>>, %arg8: memref<128x256xf32, #tpu.memory_space<vmem>>) attributes {dimension_semantics = [#tpu.dimension_semantics<parallel>], iteration_bounds = array<i64: 1>, scalar_prefetch = 0 : i64, scratch_operands = 0 : i64, tpu.core_type = #tpu.core_type<tc>, window_params = [{transform_indices = @transform_0, window_bounds = array<i64: 128, 128>}, {pipeline_mode = #tpu.pipeline_mode<synchronous>, transform_indices = @transform_1, window_bounds = array<i64: 128, 256>}, {pipeline_mode = #tpu.pipeline_mode<synchronous>, transform_indices = @transform_2, window_bounds = array<i64: 1, 256>}, {pipeline_mode = #tpu.pipeline_mode<synchronous>, transform_indices = @transform_3, window_bounds = array<i64: 256, 256>}, {pipeline_mode = #tpu.pipeline_mode<synchronous>, transform_indices = @transform_4, window_bounds = array<i64: 1, 256>}, {pipeline_mode = #tpu.pipeline_mode<synchronous>, transform_indices = @transform_5, window_bounds = array<i64: 256, 256>}, {pipeline_mode = #tpu.pipeline_mode<synchronous>, transform_indices = @transform_6, window_bounds = array<i64: 1, 256>}, {transform_indices = @transform_7, window_bounds = array<i64: 128, 256>}]} {
    %c0 = arith.constant 0 : index
    %c0_0 = arith.constant 0 : index
    %0 = vector.load %arg1[%c0, %c0_0] : memref<128x128xbf16, #tpu.memory_space<vmem>>, vector<128x128xbf16>
    %c0_1 = arith.constant 0 : index
    %c0_2 = arith.constant 0 : index
    %1 = vector.load %arg2[%c0_1, %c0_2] : memref<128x256xbf16, #tpu.memory_space<vmem>>, vector<128x256xbf16>
    %cst = arith.constant dense<0.000000e+00> : vector<128x256xf32>
    %2 = tpu.matmul %0, %1, %cst {dimension_numbers = #tpu.dot_dimension_numbers<[1], [0], [0], [1], [0, 0, 1, 1], [], []>} : vector<128x128xbf16>, vector<128x256xbf16>, vector<128x256xf32> -> vector<128x256xf32>
    %c0_3 = arith.constant 0 : index
    %c0_4 = arith.constant 0 : index
    %3 = vector.load %arg3[%c0_3, %c0_4] : memref<1x256xf32, #tpu.memory_space<vmem>>, vector<1x256xf32>
    %4 = vector.broadcast %3 : vector<1x256xf32> to vector<128x256xf32>
    %5 = arith.addf %2, %4 : vector<128x256xf32>
    %cst_5 = arith.constant 0.000000e+00 : f32
    %6 = vector.broadcast %cst_5 : f32 to vector<128x256xf32>
    %7 = arith.subf %6, %5 : vector<128x256xf32>
    %8 = math.exp %7 : vector<128x256xf32>
    %cst_6 = arith.constant 1.000000e+00 : f32
    %9 = vector.broadcast %cst_6 : f32 to vector<128x256xf32>
    %10 = arith.addf %9, %8 : vector<128x256xf32>
    %11 = tpu.reciprocal %10 {approx = true} : vector<128x256xf32> -> vector<128x256xf32>
    %12 = arith.mulf %5, %11 : vector<128x256xf32>
    %13 = arith.truncf %12 : vector<128x256xf32> to vector<128x256xbf16>
    %c0_7 = arith.constant 0 : index
    %c0_8 = arith.constant 0 : index
    %14 = vector.load %arg4[%c0_7, %c0_8] : memref<256x256xbf16, #tpu.memory_space<vmem>>, vector<256x256xbf16>
    %cst_9 = arith.constant dense<0.000000e+00> : vector<128x256xf32>
    %15 = tpu.matmul %13, %14, %cst_9 {dimension_numbers = #tpu.dot_dimension_numbers<[1], [0], [0], [1], [0, 0, 1, 1], [], []>} : vector<128x256xbf16>, vector<256x256xbf16>, vector<128x256xf32> -> vector<128x256xf32>
    %c0_10 = arith.constant 0 : index
    %c0_11 = arith.constant 0 : index
    %16 = vector.load %arg5[%c0_10, %c0_11] : memref<1x256xf32, #tpu.memory_space<vmem>>, vector<1x256xf32>
    %17 = vector.broadcast %16 : vector<1x256xf32> to vector<128x256xf32>
    %18 = arith.addf %15, %17 : vector<128x256xf32>
    %cst_12 = arith.constant 0.000000e+00 : f32
    %19 = vector.broadcast %cst_12 : f32 to vector<128x256xf32>
    %20 = arith.subf %19, %18 : vector<128x256xf32>
    %21 = math.exp %20 : vector<128x256xf32>
    %cst_13 = arith.constant 1.000000e+00 : f32
    %22 = vector.broadcast %cst_13 : f32 to vector<128x256xf32>
    %23 = arith.addf %22, %21 : vector<128x256xf32>
    %24 = tpu.reciprocal %23 {approx = true} : vector<128x256xf32> -> vector<128x256xf32>
    %25 = arith.mulf %18, %24 : vector<128x256xf32>
    %26 = arith.truncf %25 : vector<128x256xf32> to vector<128x256xbf16>
    %c0_14 = arith.constant 0 : index
    %c0_15 = arith.constant 0 : index
    %27 = vector.load %arg6[%c0_14, %c0_15] : memref<256x256xbf16, #tpu.memory_space<vmem>>, vector<256x256xbf16>
    %cst_16 = arith.constant dense<0.000000e+00> : vector<128x256xf32>
    %28 = tpu.matmul %26, %27, %cst_16 {dimension_numbers = #tpu.dot_dimension_numbers<[1], [0], [0], [1], [0, 0, 1, 1], [], []>} : vector<128x256xbf16>, vector<256x256xbf16>, vector<128x256xf32> -> vector<128x256xf32>
    %c0_17 = arith.constant 0 : index
    %c0_18 = arith.constant 0 : index
    %29 = vector.load %arg7[%c0_17, %c0_18] : memref<1x256xf32, #tpu.memory_space<vmem>>, vector<1x256xf32>
    %30 = vector.broadcast %29 : vector<1x256xf32> to vector<128x256xf32>
    %31 = arith.addf %28, %30 : vector<128x256xf32>
    %cst_19 = arith.constant 0.000000e+00 : f32
    %32 = vector.broadcast %cst_19 : f32 to vector<128x256xf32>
    %33 = arith.subf %32, %31 : vector<128x256xf32>
    %34 = math.exp %33 : vector<128x256xf32>
    %cst_20 = arith.constant 1.000000e+00 : f32
    %35 = vector.broadcast %cst_20 : f32 to vector<128x256xf32>
    %36 = arith.addf %35, %34 : vector<128x256xf32>
    %37 = tpu.reciprocal %36 {approx = true} : vector<128x256xf32> -> vector<128x256xf32>
    %38 = arith.mulf %31, %37 : vector<128x256xf32>
    %cst_21 = arith.constant 0.000000e+00 : f32
    %39 = vector.broadcast %cst_21 : f32 to vector<128x256xf32>
    %40 = arith.maximumf %38, %39 : vector<128x256xf32>
    %c0_22 = arith.constant 0 : index
    %c0_23 = arith.constant 0 : index
    %41 = vector.load %arg8[%c0_22, %c0_23] : memref<128x256xf32, #tpu.memory_space<vmem>>, vector<128x256xf32>
    tpu.vector_store %arg8[%c0_22, %c0_23], %40 {strides = array<i32>} : memref<128x256xf32, #tpu.memory_space<vmem>>, vector<128x256xf32>,
    return
  }
  func.func @transform_0(%arg0: i32) -> (i32, i32) {
    %c0_i32 = arith.constant 0 : i32
    %c0_i32_0 = arith.constant 0 : i32
    return %arg0, %c0_i32 : i32, i32
  }
  func.func @transform_1(%arg0: i32) -> (i32, i32) {
    %c0_i32 = arith.constant 0 : i32
    %c0_i32_0 = arith.constant 0 : i32
    %c0_i32_1 = arith.constant 0 : i32
    return %c0_i32, %c0_i32_0 : i32, i32
  }
  func.func @transform_2(%arg0: i32) -> (i32, i32) {
    %c0_i32 = arith.constant 0 : i32
    %c0_i32_0 = arith.constant 0 : i32
    %c0_i32_1 = arith.constant 0 : i32
    return %c0_i32, %c0_i32_0 : i32, i32
  }
  func.func @transform_3(%arg0: i32) -> (i32, i32) {
    %c0_i32 = arith.constant 0 : i32
    %c0_i32_0 = arith.constant 0 : i32
    %c0_i32_1 = arith.constant 0 : i32
    return %c0_i32, %c0_i32_0 : i32, i32
  }
  func.func @transform_4(%arg0: i32) -> (i32, i32) {
    %c0_i32 = arith.constant 0 : i32
    %c0_i32_0 = arith.constant 0 : i32
    %c0_i32_1 = arith.constant 0 : i32
    return %c0_i32, %c0_i32_0 : i32, i32
  }
  func.func @transform_5(%arg0: i32) -> (i32, i32) {
    %c0_i32 = arith.constant 0 : i32
    %c0_i32_0 = arith.constant 0 : i32
    %c0_i32_1 = arith.constant 0 : i32
    return %c0_i32, %c0_i32_0 : i32, i32
  }
  func.func @transform_6(%arg0: i32) -> (i32, i32) {
    %c0_i32 = arith.constant 0 : i32
    %c0_i32_0 = arith.constant 0 : i32
    %c0_i32_1 = arith.constant 0 : i32
    return %c0_i32, %c0_i32_0 : i32, i32
  }
  func.func @transform_7(%arg0: i32) -> (i32, i32) {
    %c0_i32 = arith.constant 0 : i32
    %c0_i32_0 = arith.constant 0 : i32
    return %arg0, %c0_i32 : i32, i32
  }
}

</mosaic_0001>

<llo_original>
// kernel: tpu_custom_call.1
$region0: #{tpu_custom_call.1}
  #allocation0 [shape = 'u32[]', space=smem, size = 0x4, offset = 0x4, fixed_abs, tag = 'smem constant byte address 0x4 - core index']
  #allocation1 [shape = 'u32[72,128]{1,0:T(1,128)}', space=vmem, size = 0x9000, scoped, tag = 'internal scratch']
  %s0 = inlined_call_operand.hbm [shape: bf16[128,128], index: 0, kind: input, shape index: {}]
  %s1 = inlined_call_operand.hbm [shape: bf16[128,256], index: 1, kind: input, shape index: {}]
  %s2 = inlined_call_operand.hbm [shape: f32[1,256], index: 2, kind: input, shape index: {}]
  %s3 = inlined_call_operand.hbm [shape: bf16[256,256], index: 3, kind: input, shape index: {}]
  %s4 = inlined_call_operand.vmem [shape: f32[1,256], index: 4, kind: input, shape index: {}]
  %s5 = inlined_call_operand.hbm [shape: bf16[256,256], index: 5, kind: input, shape index: {}]
  %s6 = inlined_call_operand.vmem [shape: f32[1,256], index: 6, kind: input, shape index: {}]
  %s7 = inlined_call_operand.hbm [shape: f32[128,256], index: 7, kind: output, shape index: {}]
  %s8 = sld [smem:[#allocation0]]
  $region58: #{tpu_custom_call.1} parent=0
    _
  %s10 = ssub.s32 1, %s8
  %s11 = scalar_select 0, %s10, %s8
  $region1: #{tpu_custom_call.1} parent=0
    #allocation2 [shape = 'u8[32768]{0}', space=vmem, size = 0x8000, scoped, tag = 'input window, operand 0, single buffered']
    #allocation3 [shape = 's32[1]{0}', space=sflag, size = 0x4, scoped, tag = 'scoped memory for tpu_custom_call.1']
    #allocation4 [shape = 's32[1]{0}', space=sflag, size = 0x4, scoped, tag = 'scoped memory for tpu_custom_call.1']
    #allocation5 [shape = 'u8[65536]{0}', space=vmem, size = 0x10000, scoped, tag = 'input window, operand 1, single buffered']
    #allocation6 [shape = 's32[1]{0}', space=sflag, size = 0x4, scoped, tag = 'scoped memory for tpu_custom_call.1']
    #allocation7 [shape = 'u8[1024]{0}', space=vmem, size = 0x400, scoped, tag = 'input window, operand 2, single buffered']
    #allocation8 [shape = 'u8[131072]{0}', space=vmem, size = 0x20000, scoped, tag = 'input window, operand 3, single buffered']
    #allocation9 [shape = 's32[1]{0}', space=sflag, size = 0x4, scoped, tag = 'scoped memory for tpu_custom_call.1']
    #allocation10 [shape = 'u8[131072]{0}', space=vmem, size = 0x20000, scoped, tag = 'input window, operand 5, single buffered']
    #allocation11 [shape = 'u8[131072]{0}', space=vmem, size = 0x20000, scoped, tag = 'output window, operand 0, single buffered']
    %12 = vsyncpa [#allocation3], 0
    %13 = vsyncpa [#allocation6], 0
    %14 = vsyncpa [#allocation9], 0
    %15 = vsyncpa [#allocation4], 0
    // Predicated region
    $region2: #{tpu_custom_call.1} parent=1 // pred_check
      _
    $region3: #{tpu_custom_call.1} parent=1 // pred_check_branch
      %17 = sbr.rel (0) target = $region5
    $region4: #{tpu_custom_call.1} parent=1 // pred_region
      %19 = vsyncadd [#allocation3], 0
      %s20 = sshll.u32 %s0, 4
      %s21 = int_to_ptr.hbm [resolvable:$true] %s20
      %s22 = sshll.u32 [#allocation2], 4
      %s23 = int_to_ptr.vmem [resolvable:$true] %s22
      %28 = dma.hbm_to_vmem [thread:$0]  %s21, 1024, %s23, [#allocation3], 64, 64, 4
    $region5: #{tpu_custom_call.1} parent=1 // pred_fallthru
      _
    // Predicated region
    $region6: #{tpu_custom_call.1} parent=1 // pred_check
      _
    $region7: #{tpu_custom_call.1} parent=1 // pred_check_branch
      %30 = sbr.rel (0) target = $region9
    $region8: #{tpu_custom_call.1} parent=1 // pred_region
      %32 = vsyncadd [#allocation6], 0
      %s33 = sshll.u32 %s1, 4
      %s34 = int_to_ptr.hbm [resolvable:$true] %s33
      %s35 = sshll.u32 [#allocation5], 4
      %s36 = int_to_ptr.vmem [resolvable:$true] %s35
      %41 = dma.hbm_to_vmem [thread:$0]  %s34, 2048, %s36, [#allocation6], 128, 128, 8
    $region9: #{tpu_custom_call.1} parent=1 // pred_fallthru
      _
    // Predicated region
    $region10: #{tpu_custom_call.1} parent=1 // pred_check
      _
    $region11: #{tpu_custom_call.1} parent=1 // pred_check_branch
      %43 = sbr.rel (0) target = $region13
    $region12: #{tpu_custom_call.1} parent=1 // pred_region
      %45 = vsyncadd [#allocation6], 0
      %s47 = sshll.u32 %s2, 4
      %s48 = int_to_ptr.hbm [resolvable:$true] %s47
      %s49 = sshll.u32 [#allocation7], 4
      %s50 = int_to_ptr.vmem [resolvable:$true] %s49
      %52 = dma.hbm_to_vmem [thread:$0]  %s48, 32, %s50, [#allocation6]
    $region13: #{tpu_custom_call.1} parent=1 // pred_fallthru
      _
    // Predicated region
    $region14: #{tpu_custom_call.1} parent=1 // pred_check
      _
    $region15: #{tpu_custom_call.1} parent=1 // pred_check_branch
      %54 = sbr.rel (0) target = $region17
    $region16: #{tpu_custom_call.1} parent=1 // pred_region
      %56 = vsyncadd [#allocation9], 0
      %s57 = sshll.u32 %s3, 4
      %s58 = int_to_ptr.hbm [resolvable:$true] %s57
      %s59 = sshll.u32 [#allocation8], 4
      %s60 = int_to_ptr.vmem [resolvable:$true] %s59
      %65 = dma.hbm_to_vmem [thread:$0]  %s58, 4096, %s60, [#allocation9], 128, 128, 8
    $region17: #{tpu_custom_call.1} parent=1 // pred_fallthru
      _
    // Predicated region
    $region18: #{tpu_custom_call.1} parent=1 // pred_check
      _
    $region19: #{tpu_custom_call.1} parent=1 // pred_check_branch
      %67 = sbr.rel (0) target = $region21
    $region20: #{tpu_custom_call.1} parent=1 // pred_region
      _
    $region21: #{tpu_custom_call.1} parent=1 // pred_fallthru
      _
    // Predicated region
    $region22: #{tpu_custom_call.1} parent=1 // pred_check
      _
    $region23: #{tpu_custom_call.1} parent=1 // pred_check_branch
      %69 = sbr.rel (0) target = $region25
    $region24: #{tpu_custom_call.1} parent=1 // pred_region
      %71 = vsyncadd [#allocation9], 0
      %s72 = sshll.u32 %s5, 4
      %s73 = int_to_ptr.hbm [resolvable:$true] %s72
      %s74 = sshll.u32 [#allocation10], 4
      %s75 = int_to_ptr.vmem [resolvable:$true] %s74
      %80 = dma.hbm_to_vmem [thread:$0]  %s73, 4096, %s75, [#allocation9], 128, 128, 8
    $region25: #{tpu_custom_call.1} parent=1 // pred_fallthru
      _
    // Predicated region
    $region26: #{tpu_custom_call.1} parent=1 // pred_check
      _
    $region27: #{tpu_custom_call.1} parent=1 // pred_check_branch
      %82 = sbr.rel (0) target = $region29
    $region28: #{tpu_custom_call.1} parent=1 // pred_region
      _
    $region29: #{tpu_custom_call.1} parent=1 // pred_fallthru
      _
    // Predicated region
    $region30: #{tpu_custom_call.1} parent=1 // pred_check
      _
    $region31: #{tpu_custom_call.1} parent=1 // pred_check_branch
      %84 = sbr.rel (0) target = $region33
    $region32: #{tpu_custom_call.1} parent=1 // pred_region
      %86 = dma.done [#allocation3], 1024
    $region33: #{tpu_custom_call.1} parent=1 // pred_fallthru
      _
    // Predicated region
    $region34: #{tpu_custom_call.1} parent=1 // pred_check
      _
    $region35: #{tpu_custom_call.1} parent=1 // pred_check_branch
      %88 = sbr.rel (0) target = $region37
    $region36: #{tpu_custom_call.1} parent=1 // pred_region
      %90 = dma.done [#allocation6], 2048
    $region37: #{tpu_custom_call.1} parent=1 // pred_fallthru
      _
    // Predicated region
    $region38: #{tpu_custom_call.1} parent=1 // pred_check
      _
    $region39: #{tpu_custom_call.1} parent=1 // pred_check_branch
      %92 = sbr.rel (0) target = $region41
    $region40: #{tpu_custom_call.1} parent=1 // pred_region
      %94 = dma.done [#allocation6], 32
    $region41: #{tpu_custom_call.1} parent=1 // pred_fallthru
      _
    // Predicated region
    $region42: #{tpu_custom_call.1} parent=1 // pred_check
      _
    $region43: #{tpu_custom_call.1} parent=1 // pred_check_branch
      %96 = sbr.rel (0) target = $region45
    $region44: #{tpu_custom_call.1} parent=1 // pred_region
      %98 = dma.done [#allocation9], 4096
    $region45: #{tpu_custom_call.1} parent=1 // pred_fallthru
      _
    // Predicated region
    $region46: #{tpu_custom_call.1} parent=1 // pred_check
      _
    $region47: #{tpu_custom_call.1} parent=1 // pred_check_branch
      %100 = sbr.rel (0) target = $region49
    $region48: #{tpu_custom_call.1} parent=1 // pred_region
      %102 = dma.done [#allocation9], 4096
    $region49: #{tpu_custom_call.1} parent=1 // pred_fallthru
      _
    %v103 = vld [vmem:[#allocation2] sm:$0xf]
    %v104 = vld [vmem:[#allocation2 + $0x4] sm:$0xf]
    %v105 = vld [vmem:[#allocation2 + $0x8] sm:$0xf]
    %v106 = vld [vmem:[#allocation2 + $0xc] sm:$0xf]
    %v107 = vld [vmem:[#allocation2 + $0x10] sm:$0xf]
    %v108 = vld [vmem:[#allocation2 + $0x14] sm:$0xf]
    %v109 = vld [vmem:[#allocation2 + $0x18] sm:$0xf]
    %v110 = vld [vmem:[#allocation2 + $0x1c] sm:$0xf]
    %v111 = vld [vmem:[#allocation2 + $0x20] sm:$0xf]
    %v112 = vld [vmem:[#allocation2 + $0x24] sm:$0xf]
    %v113 = vld [vmem:[#allocation2 + $0x28] sm:$0xf]
    %v114 = vld [vmem:[#allocation2 + $0x2c] sm:$0xf]
    %v115 = vld [vmem:[#allocation2 + $0x30] sm:$0xf]
    %v116 = vld [vmem:[#allocation2 + $0x34] sm:$0xf]
    %v117 = vld [vmem:[#allocation2 + $0x38] sm:$0xf]
    %v118 = vld [vmem:[#allocation2 + $0x3c] sm:$0xf]
    %v119 = vld [vmem:[#allocation5] sm:$0xff]
    %v120 = vld [vmem:[#allocation5 + $0x8] sm:$0xff]
    %v121 = vld [vmem:[#allocation5 + $0x10] sm:$0xff]
    %v122 = vld [vmem:[#allocation5 + $0x18] sm:$0xff]
    %v123 = vld [vmem:[#allocation5 + $0x20] sm:$0xff]
    %v124 = vld [vmem:[#allocation5 + $0x28] sm:$0xff]
    %v125 = vld [vmem:[#allocation5 + $0x30] sm:$0xff]
    %v126 = vld [vmem:[#allocation5 + $0x38] sm:$0xff]
    %v127 = vld [vmem:[#allocation5 + $0x40] sm:$0xff]
    %v128 = vld [vmem:[#allocation5 + $0x48] sm:$0xff]
    %v129 = vld [vmem:[#allocation5 + $0x50] sm:$0xff]
    %v130 = vld [vmem:[#allocation5 + $0x58] sm:$0xff]
    %v131 = vld [vmem:[#allocation5 + $0x60] sm:$0xff]
    %v132 = vld [vmem:[#allocation5 + $0x68] sm:$0xff]
    %v133 = vld [vmem:[#allocation5 + $0x70] sm:$0xff]
    %v134 = vld [vmem:[#allocation5 + $0x78] sm:$0xff]
    %v135 = vld [vmem:[#allocation7] sm:$0x3]
    %v137 = vperm.slane %v135, 0
    %v138 = vperm.slane %v135, 1
    %v157 = vunpack.c.l.b16 %v103
    %v158 = vunpack.c.l.b16 %v104
    %v159 = vunpack.c.l.b16 %v105
    %v160 = vunpack.c.l.b16 %v106
    %v161 = vunpack.c.l.b16 %v107
    %v162 = vunpack.c.l.b16 %v108
    %v163 = vunpack.c.l.b16 %v109
    %v164 = vunpack.c.l.b16 %v110
    %v165 = vunpack.c.l.b16 %v111
    %v166 = vunpack.c.l.b16 %v112
    %v167 = vunpack.c.l.b16 %v113
    %v168 = vunpack.c.l.b16 %v114
    %v169 = vunpack.c.l.b16 %v115
    %v170 = vunpack.c.l.b16 %v116
    %v171 = vunpack.c.l.b16 %v117
    %v172 = vunpack.c.l.b16 %v118
    %v173 = vpack.c.b16 %v158, %v157
    %v174 = vpack.c.b16 %v160, %v159
    %v175 = vpack.c.b16 %v162, %v161
    %v176 = vpack.c.b16 %v164, %v163
    %v177 = vpack.c.b16 %v166, %v165
    %v178 = vpack.c.b16 %v168, %v167
    %v179 = vpack.c.b16 %v170, %v169
    %v180 = vpack.c.b16 %v172, %v171
    %v205 = vunpack.c.l.b16 %v119
    %v206 = vunpack.c.h.b16 %v119
    %v207 = vunpack.c.l.b16 %v120
    %v208 = vunpack.c.h.b16 %v120
    %v209 = vunpack.c.l.b16 %v121
    %v210 = vunpack.c.h.b16 %v121
    %v211 = vunpack.c.l.b16 %v122
    %v212 = vunpack.c.h.b16 %v122
    %v213 = vunpack.c.l.b16 %v123
    %v214 = vunpack.c.h.b16 %v123
    %v215 = vunpack.c.l.b16 %v124
    %v216 = vunpack.c.h.b16 %v124
    %v217 = vunpack.c.l.b16 %v125
    %v218 = vunpack.c.h.b16 %v125
    %v219 = vunpack.c.l.b16 %v126
    %v220 = vunpack.c.h.b16 %v126
    %v221 = vunpack.c.l.b16 %v127
    %v222 = vunpack.c.h.b16 %v127
    %v223 = vunpack.c.l.b16 %v128
    %v224 = vunpack.c.h.b16 %v128
    %v225 = vunpack.c.l.b16 %v129
    %v226 = vunpack.c.h.b16 %v129
    %v227 = vunpack.c.l.b16 %v130
    %v228 = vunpack.c.h.b16 %v130
    %v229 = vunpack.c.l.b16 %v131
    %v230 = vunpack.c.h.b16 %v131
    %v231 = vunpack.c.l.b16 %v132
    %v232 = vunpack.c.h.b16 %v132
    %v233 = vunpack.c.l.b16 %v133
    %v234 = vunpack.c.h.b16 %v133
    %v235 = vunpack.c.l.b16 %v134
    %v236 = vunpack.c.h.b16 %v134
    %v237 = vpack.c.b16 %v207, %v205
    %v238 = vpack.c.b16 %v208, %v206
    %v239 = vpack.c.b16 %v211, %v209
    %v240 = vpack.c.b16 %v212, %v210
    %v241 = vpack.c.b16 %v215, %v213
    %v242 = vpack.c.b16 %v216, %v214
    %v243 = vpack.c.b16 %v219, %v217
    %v244 = vpack.c.b16 %v220, %v218
    %v245 = vpack.c.b16 %v223, %v221
    %v246 = vpack.c.b16 %v224, %v222
    %v247 = vpack.c.b16 %v227, %v225
    %v248 = vpack.c.b16 %v228, %v226
    %v249 = vpack.c.b16 %v231, %v229
    %v250 = vpack.c.b16 %v232, %v230
    %v251 = vpack.c.b16 %v235, %v233
    %v252 = vpack.c.b16 %v236, %v234
    %269 = vmatpush.bf16.msra.mxu0 %v251
    %270 = vmatpush.bf16.msra.mxu0 %v249
    %271 = vmatpush.bf16.msra.mxu0 %v247
    %272 = vmatpush.bf16.msra.mxu0 %v245
    %273 = vmatpush.bf16.msra.mxu0 %v243
    %274 = vmatpush.bf16.msra.mxu0 %v241
    %275 = vmatpush.bf16.msra.mxu0 %v239
    %276 = vmatpush.bf16.msra.mxu0 %v237
    %277 = vmatmul.bf16.gmra.mxu0 %v173
    %v278 = vpop.f32.mrf.mxu0
    %v279 = vadd.f32 %v137, %v278
    %v280 = vpop.f32.mrf.mxu0
    %v281 = vadd.f32 %v137, %v280
    %282 = vmatmul.bf16.gmra.mxu0 %v174
    %v283 = vpop.f32.mrf.mxu0
    %v284 = vadd.f32 %v137, %v283
    %v285 = vpop.f32.mrf.mxu0
    %v286 = vadd.f32 %v137, %v285
    %287 = vmatmul.bf16.gmra.mxu0 %v175
    %v288 = vpop.f32.mrf.mxu0
    %v289 = vadd.f32 %v137, %v288
    %v290 = vpop.f32.mrf.mxu0
    %v291 = vadd.f32 %v137, %v290
    %292 = vmatmul.bf16.gmra.mxu0 %v176
    %v293 = vpop.f32.mrf.mxu0
    %v294 = vadd.f32 %v137, %v293
    %v295 = vpop.f32.mrf.mxu0
    %v296 = vadd.f32 %v137, %v295
    %297 = vmatmul.bf16.gmra.mxu0 %v177
    %v298 = vpop.f32.mrf.mxu0
    %v299 = vadd.f32 %v137, %v298
    %v300 = vpop.f32.mrf.mxu0
    %v301 = vadd.f32 %v137, %v300
    %302 = vmatmul.bf16.gmra.mxu0 %v178
    %v303 = vpop.f32.mrf.mxu0
    %v304 = vadd.f32 %v137, %v303
    %v305 = vpop.f32.mrf.mxu0
    %v306 = vadd.f32 %v137, %v305
    %307 = vmatmul.bf16.gmra.mxu0 %v179
    %v308 = vpop.f32.mrf.mxu0
    %v309 = vadd.f32 %v137, %v308
    %v310 = vpop.f32.mrf.mxu0
    %v311 = vadd.f32 %v137, %v310
    %312 = vmatmul.bf16.gmra.mxu0 %v180
    %v313 = vpop.f32.mrf.mxu0
    %v314 = vadd.f32 %v137, %v313
    %v315 = vpop.f32.mrf.mxu0
    %v316 = vadd.f32 %v137, %v315
    %317 = vdwg.mxu0
    %318 = vmatpush.bf16.msra.mxu0 %v252
    %319 = vmatpush.bf16.msra.mxu0 %v250
    %320 = vmatpush.bf16.msra.mxu0 %v248
    %321 = vmatpush.bf16.msra.mxu0 %v246
    %322 = vmatpush.bf16.msra.mxu0 %v244
    %323 = vmatpush.bf16.msra.mxu0 %v242
    %324 = vmatpush.bf16.msra.mxu0 %v240
    %325 = vmatpush.bf16.msra.mxu0 %v238
    %326 = vmatmul.bf16.gmra.mxu0 %v173
    %v327 = vpop.f32.mrf.mxu0
    %v328 = vadd.f32 %v138, %v327
    %v329 = vpop.f32.mrf.mxu0
    %v330 = vadd.f32 %v138, %v329
    %331 = vmatmul.bf16.gmra.mxu0 %v174
    %v332 = vpop.f32.mrf.mxu0
    %v333 = vadd.f32 %v138, %v332
    %v334 = vpop.f32.mrf.mxu0
    %v335 = vadd.f32 %v138, %v334
    %336 = vmatmul.bf16.gmra.mxu0 %v175
    %v337 = vpop.f32.mrf.mxu0
    %v338 = vadd.f32 %v138, %v337
    %v339 = vpop.f32.mrf.mxu0
    %v340 = vadd.f32 %v138, %v339
    %341 = vmatmul.bf16.gmra.mxu0 %v176
    %v342 = vpop.f32.mrf.mxu0
    %v343 = vadd.f32 %v138, %v342
    %v344 = vpop.f32.mrf.mxu0
    %v345 = vadd.f32 %v138, %v344
    %346 = vmatmul.bf16.gmra.mxu0 %v177
    %v347 = vpop.f32.mrf.mxu0
    %v348 = vadd.f32 %v138, %v347
    %v349 = vpop.f32.mrf.mxu0
    %v350 = vadd.f32 %v138, %v349
    %351 = vmatmul.bf16.gmra.mxu0 %v178
    %v352 = vpop.f32.mrf.mxu0
    %v353 = vadd.f32 %v138, %v352
    %v354 = vpop.f32.mrf.mxu0
    %v355 = vadd.f32 %v138, %v354
    %356 = vmatmul.bf16.gmra.mxu0 %v179
    %v357 = vpop.f32.mrf.mxu0
    %v358 = vadd.f32 %v138, %v357
    %v359 = vpop.f32.mrf.mxu0
    %v360 = vadd.f32 %v138, %v359
    %361 = vmatmul.bf16.gmra.mxu0 %v180
    %v362 = vpop.f32.mrf.mxu0
    %v363 = vadd.f32 %v138, %v362
    %v364 = vpop.f32.mrf.mxu0
    %v365 = vadd.f32 %v138, %v364
    %366 = vdwg.mxu0
    %v367 = vsub.f32 0.0, %v279
    %v368 = vsub.f32 0.0, %v328
    %v369 = vsub.f32 0.0, %v281
    %v370 = vsub.f32 0.0, %v330
    %v371 = vsub.f32 0.0, %v284
    %v372 = vsub.f32 0.0, %v333
    %v373 = vsub.f32 0.0, %v286
    %v374 = vsub.f32 0.0, %v335
    %v375 = vsub.f32 0.0, %v289
    %v376 = vsub.f32 0.0, %v338
    %v377 = vsub.f32 0.0, %v291
    %v378 = vsub.f32 0.0, %v340
    %v379 = vsub.f32 0.0, %v294
    %v380 = vsub.f32 0.0, %v343
    %v381 = vsub.f32 0.0, %v296
    %v382 = vsub.f32 0.0, %v345
    %v383 = vsub.f32 0.0, %v299
    %v384 = vsub.f32 0.0, %v348
    %v385 = vsub.f32 0.0, %v301
    %v386 = vsub.f32 0.0, %v350
    %v387 = vsub.f32 0.0, %v304
    %v388 = vsub.f32 0.0, %v353
    %v389 = vsub.f32 0.0, %v306
    %v390 = vsub.f32 0.0, %v355
    %v391 = vsub.f32 0.0, %v309
    %v392 = vsub.f32 0.0, %v358
    %v393 = vsub.f32 0.0, %v311
    %v394 = vsub.f32 0.0, %v360
    %v395 = vsub.f32 0.0, %v314
    %v396 = vsub.f32 0.0, %v363
    %v397 = vsub.f32 0.0, %v316
    %v398 = vsub.f32 0.0, %v365
    %v399 = vmul.f32 %v367, 1.442695
    %v400 = vpow.pop %v399
    %v401 = vmul.f32 %v368, 1.442695
    %v402 = vpow.pop %v401
    %v403 = vmul.f32 %v369, 1.442695
    %v404 = vpow.pop %v403
    %v405 = vmul.f32 %v370, 1.442695
    %v406 = vpow.pop %v405
    %v407 = vmul.f32 %v371, 1.442695
    %v408 = vpow.pop %v407
    %v409 = vmul.f32 %v372, 1.442695
    %v410 = vpow.pop %v409
    %v411 = vmul.f32 %v373, 1.442695
    %v412 = vpow.pop %v411
    %v413 = vmul.f32 %v374, 1.442695
    %v414 = vpow.pop %v413
    %v415 = vmul.f32 %v375, 1.442695
    %v416 = vpow.pop %v415
    %v417 = vmul.f32 %v376, 1.442695
    %v418 = vpow.pop %v417
    %v419 = vmul.f32 %v377, 1.442695
    %v420 = vpow.pop %v419
    %v421 = vmul.f32 %v378, 1.442695
    %v422 = vpow.pop %v421
    %v423 = vmul.f32 %v379, 1.442695
    %v424 = vpow.pop %v423
    %v425 = vmul.f32 %v380, 1.442695
    %v426 = vpow.pop %v425
    %v427 = vmul.f32 %v381, 1.442695
    %v428 = vpow.pop %v427
    %v429 = vmul.f32 %v382, 1.442695
    %v430 = vpow.pop %v429
    %v431 = vmul.f32 %v383, 1.442695
    %v432 = vpow.pop %v431
    %v433 = vmul.f32 %v384, 1.442695
    %v434 = vpow.pop %v433
    %v435 = vmul.f32 %v385, 1.442695
    %v436 = vpow.pop %v435
    %v437 = vmul.f32 %v386, 1.442695
    %v438 = vpow.pop %v437
    %v439 = vmul.f32 %v387, 1.442695
    %v440 = vpow.pop %v439
    %v441 = vmul.f32 %v388, 1.442695
    %v442 = vpow.pop %v441
    %v443 = vmul.f32 %v389, 1.442695
    %v444 = vpow.pop %v443
    %v445 = vmul.f32 %v390, 1.442695
    %v446 = vpow.pop %v445
    %v447 = vmul.f32 %v391, 1.442695
    %v448 = vpow.pop %v447
    %v449 = vmul.f32 %v392, 1.442695
    %v450 = vpow.pop %v449
    %v451 = vmul.f32 %v393, 1.442695
    %v452 = vpow.pop %v451
    %v453 = vmul.f32 %v394, 1.442695
    %v454 = vpow.pop %v453
    %v455 = vmul.f32 %v395, 1.442695
    %v456 = vpow.pop %v455
    %v457 = vmul.f32 %v396, 1.442695
    %v458 = vpow.pop %v457
    %v459 = vmul.f32 %v397, 1.442695
    %v460 = vpow.pop %v459
    %v461 = vmul.f32 %v398, 1.442695
    %v462 = vpow.pop %v461
    %v463 = vadd.f32 %v400, 1.0
    %v464 = vadd.f32 %v402, 1.0
    %v465 = vadd.f32 %v404, 1.0
    %v466 = vadd.f32 %v406, 1.0
    %v467 = vadd.f32 %v408, 1.0
    %v468 = vadd.f32 %v410, 1.0
    %v469 = vadd.f32 %v412, 1.0
    %v470 = vadd.f32 %v414, 1.0
    %v471 = vadd.f32 %v416, 1.0
    %v472 = vadd.f32 %v418, 1.0
    %v473 = vadd.f32 %v420, 1.0
    %v474 = vadd.f32 %v422, 1.0
    %v475 = vadd.f32 %v424, 1.0
    %v476 = vadd.f32 %v426, 1.0
    %v477 = vadd.f32 %v428, 1.0
    %v478 = vadd.f32 %v430, 1.0
    %v479 = vadd.f32 %v432, 1.0
    %v480 = vadd.f32 %v434, 1.0
    %v481 = vadd.f32 %v436, 1.0
    %v482 = vadd.f32 %v438, 1.0
    %v483 = vadd.f32 %v440, 1.0
    %v484 = vadd.f32 %v442, 1.0
    %v485 = vadd.f32 %v444, 1.0
    %v486 = vadd.f32 %v446, 1.0
    %v487 = vadd.f32 %v448, 1.0
    %v488 = vadd.f32 %v450, 1.0
    %v489 = vadd.f32 %v452, 1.0
    %v490 = vadd.f32 %v454, 1.0
    %v491 = vadd.f32 %v456, 1.0
    %v492 = vadd.f32 %v458, 1.0
    %v493 = vadd.f32 %v460, 1.0
    %v494 = vadd.f32 %v462, 1.0
    %v495 = vrcp.pop %v463
    %v496 = vrcp.pop %v464
    %v497 = vrcp.pop %v465
    %v498 = vrcp.pop %v466
    %v499 = vrcp.pop %v467
    %v500 = vrcp.pop %v468
    %v501 = vrcp.pop %v469
    %v502 = vrcp.pop %v470
    %v503 = vrcp.pop %v471
    %v504 = vrcp.pop %v472
    %v505 = vrcp.pop %v473
    %v506 = vrcp.pop %v474
    %v507 = vrcp.pop %v475
    %v508 = vrcp.pop %v476
    %v509 = vrcp.pop %v477
    %v510 = vrcp.pop %v478
    %v511 = vrcp.pop %v479
    %v512 = vrcp.pop %v480
    %v513 = vrcp.pop %v481
    %v514 = vrcp.pop %v482
    %v515 = vrcp.pop %v483
    %v516 = vrcp.pop %v484
    %v517 = vrcp.pop %v485
    %v518 = vrcp.pop %v486
    %v519 = vrcp.pop %v487
    %v520 = vrcp.pop %v488
    %v521 = vrcp.pop %v489
    %v522 = vrcp.pop %v490
    %v523 = vrcp.pop %v491
    %v524 = vrcp.pop %v492
    %v525 = vrcp.pop %v493
    %v526 = vrcp.pop %v494
    %v527 = vmul.f32 %v279, %v495
    %v528 = vmul.f32 %v328, %v496
    %v529 = vmul.f32 %v281, %v497
    %v530 = vmul.f32 %v330, %v498
    %v531 = vmul.f32 %v284, %v499
    %v532 = vmul.f32 %v333, %v500
    %v533 = vmul.f32 %v286, %v501
    %v534 = vmul.f32 %v335, %v502
    %v535 = vmul.f32 %v289, %v503
    %v536 = vmul.f32 %v338, %v504
    %v537 = vmul.f32 %v291, %v505
    %v538 = vmul.f32 %v340, %v506
    %v539 = vmul.f32 %v294, %v507
    %v540 = vmul.f32 %v343, %v508
    %v541 = vmul.f32 %v296, %v509
    %v542 = vmul.f32 %v345, %v510
    %v543 = vmul.f32 %v299, %v511
    %v544 = vmul.f32 %v348, %v512
    %v545 = vmul.f32 %v301, %v513
    %v546 = vmul.f32 %v350, %v514
    %v547 = vmul.f32 %v304, %v515
    %v548 = vmul.f32 %v353, %v516
    %v549 = vmul.f32 %v306, %v517
    %v550 = vmul.f32 %v355, %v518
    %v551 = vmul.f32 %v309, %v519
    %v552 = vmul.f32 %v358, %v520
    %v553 = vmul.f32 %v311, %v521
    %v554 = vmul.f32 %v360, %v522
    %v555 = vmul.f32 %v314, %v523
    %v556 = vmul.f32 %v363, %v524
    %v557 = vmul.f32 %v316, %v525
    %v558 = vmul.f32 %v365, %v526
    %v559 = vpack.c.bf16 %v529, %v527
    %v560 = vpack.c.bf16 %v530, %v528
    %v561 = vpack.c.bf16 %v533, %v531
    %v562 = vpack.c.bf16 %v534, %v532
    %v563 = vpack.c.bf16 %v537, %v535
    %v564 = vpack.c.bf16 %v538, %v536
    %v565 = vpack.c.bf16 %v541, %v539
    %v566 = vpack.c.bf16 %v542, %v540
    %v567 = vpack.c.bf16 %v545, %v543
    %v568 = vpack.c.bf16 %v546, %v544
    %v569 = vpack.c.bf16 %v549, %v547
    %v570 = vpack.c.bf16 %v550, %v548
    %v571 = vpack.c.bf16 %v553, %v551
    %v572 = vpack.c.bf16 %v554, %v552
    %v573 = vpack.c.bf16 %v557, %v555
    %v574 = vpack.c.bf16 %v558, %v556
    %v575 = vld [vmem:[#allocation8] sm:$0xff]
    %v576 = vld [vmem:[#allocation8 + $0x8] sm:$0xff]
    %v577 = vld [vmem:[#allocation8 + $0x10] sm:$0xff]
    %v578 = vld [vmem:[#allocation8 + $0x18] sm:$0xff]
    %v579 = vld [vmem:[#allocation8 + $0x20] sm:$0xff]
    %v580 = vld [vmem:[#allocation8 + $0x28] sm:$0xff]
    %v581 = vld [vmem:[#allocation8 + $0x30] sm:$0xff]
    %v582 = vld [vmem:[#allocation8 + $0x38] sm:$0xff]
    %v583 = vld [vmem:[#allocation8 + $0x40] sm:$0xff]
    %v584 = vld [vmem:[#allocation8 + $0x48] sm:$0xff]
    %v585 = vld [vmem:[#allocation8 + $0x50] sm:$0xff]
    %v586 = vld [vmem:[#allocation8 + $0x58] sm:$0xff]
    %v587 = vld [vmem:[#allocation8 + $0x60] sm:$0xff]
    %v588 = vld [vmem:[#allocation8 + $0x68] sm:$0xff]
    %v589 = vld [vmem:[#allocation8 + $0x70] sm:$0xff]
    %v590 = vld [vmem:[#allocation8 + $0x78] sm:$0xff]
    %v591 = vld [vmem:[#allocation8 + $0x80] sm:$0xff]
    %v592 = vld [vmem:[#allocation8 + $0x88] sm:$0xff]
    %v593 = vld [vmem:[#allocation8 + $0x90] sm:$0xff]
    %v594 = vld [vmem:[#allocation8 + $0x98] sm:$0xff]
    %v595 = vld [vmem:[#allocation8 + $0xa0] sm:$0xff]
    %v596 = vld [vmem:[#allocation8 + $0xa8] sm:$0xff]
    %v597 = vld [vmem:[#allocation8 + $0xb0] sm:$0xff]
    %v598 = vld [vmem:[#allocation8 + $0xb8] sm:$0xff]
    %v599 = vld [vmem:[#allocation8 + $0xc0] sm:$0xff]
    %v600 = vld [vmem:[#allocation8 + $0xc8] sm:$0xff]
    %v601 = vld [vmem:[#allocation8 + $0xd0] sm:$0xff]
    %v602 = vld [vmem:[#allocation8 + $0xd8] sm:$0xff]
    %v603 = vld [vmem:[#allocation8 + $0xe0] sm:$0xff]
    %v604 = vld [vmem:[#allocation8 + $0xe8] sm:$0xff]
    %v605 = vld [vmem:[#allocation8 + $0xf0] sm:$0xff]
    %v606 = vld [vmem:[#allocation8 + $0xf8] sm:$0xff]
    %v607 = vld [vmem:[%s4] sm:$0x3]
    %v609 = vperm.slane %v607, 0
    %v610 = vperm.slane %v607, 1
    %v645 = vunpack.c.l.b16 %v575
    %v646 = vunpack.c.h.b16 %v575
    %v647 = vunpack.c.l.b16 %v576
    %v648 = vunpack.c.h.b16 %v576
    %v649 = vunpack.c.l.b16 %v577
    %v650 = vunpack.c.h.b16 %v577
    %v651 = vunpack.c.l.b16 %v578
    %v652 = vunpack.c.h.b16 %v578
    %v653 = vunpack.c.l.b16 %v579
    %v654 = vunpack.c.h.b16 %v579
    %v655 = vunpack.c.l.b16 %v580
    %v656 = vunpack.c.h.b16 %v580
    %v657 = vunpack.c.l.b16 %v581
    %v658 = vunpack.c.h.b16 %v581
    %v659 = vunpack.c.l.b16 %v582
    %v660 = vunpack.c.h.b16 %v582
    %v661 = vunpack.c.l.b16 %v583
    %v662 = vunpack.c.h.b16 %v583
    %v663 = vunpack.c.l.b16 %v584
    %v664 = vunpack.c.h.b16 %v584
    %v665 = vunpack.c.l.b16 %v585
    %v666 = vunpack.c.h.b16 %v585
    %v667 = vunpack.c.l.b16 %v586
    %v668 = vunpack.c.h.b16 %v586
    %v669 = vunpack.c.l.b16 %v587
    %v670 = vunpack.c.h.b16 %v587
    %v671 = vunpack.c.l.b16 %v588
    %v672 = vunpack.c.h.b16 %v588
    %v673 = vunpack.c.l.b16 %v589
    %v674 = vunpack.c.h.b16 %v589
    %v675 = vunpack.c.l.b16 %v590
    %v676 = vunpack.c.h.b16 %v590
    %v677 = vunpack.c.l.b16 %v591
    %v678 = vunpack.c.h.b16 %v591
    %v679 = vunpack.c.l.b16 %v592
    %v680 = vunpack.c.h.b16 %v592
    %v681 = vunpack.c.l.b16 %v593
    %v682 = vunpack.c.h.b16 %v593
    %v683 = vunpack.c.l.b16 %v594
    %v684 = vunpack.c.h.b16 %v594
    %v685 = vunpack.c.l.b16 %v595
    %v686 = vunpack.c.h.b16 %v595
    %v687 = vunpack.c.l.b16 %v596
    %v688 = vunpack.c.h.b16 %v596
    %v689 = vunpack.c.l.b16 %v597
    %v690 = vunpack.c.h.b16 %v597
    %v691 = vunpack.c.l.b16 %v598
    %v692 = vunpack.c.h.b16 %v598
    %v693 = vunpack.c.l.b16 %v599
    %v694 = vunpack.c.h.b16 %v599
    %v695 = vunpack.c.l.b16 %v600
    %v696 = vunpack.c.h.b16 %v600
    %v697 = vunpack.c.l.b16 %v601
    %v698 = vunpack.c.h.b16 %v601
    %v699 = vunpack.c.l.b16 %v602
    %v700 = vunpack.c.h.b16 %v602
    %v701 = vunpack.c.l.b16 %v603
    %v702 = vunpack.c.h.b16 %v603
    %v703 = vunpack.c.l.b16 %v604
    %v704 = vunpack.c.h.b16 %v604
    %v705 = vunpack.c.l.b16 %v605
    %v706 = vunpack.c.h.b16 %v605
    %v707 = vunpack.c.l.b16 %v606
    %v708 = vunpack.c.h.b16 %v606
    %v709 = vpack.c.b16 %v647, %v645
    %v710 = vpack.c.b16 %v648, %v646
    %v711 = vpack.c.b16 %v651, %v649
    %v712 = vpack.c.b16 %v652, %v650
    %v713 = vpack.c.b16 %v655, %v653
    %v714 = vpack.c.b16 %v656, %v654
    %v715 = vpack.c.b16 %v659, %v657
    %v716 = vpack.c.b16 %v660, %v658
    %v717 = vpack.c.b16 %v663, %v661
    %v718 = vpack.c.b16 %v664, %v662
    %v719 = vpack.c.b16 %v667, %v665
    %v720 = vpack.c.b16 %v668, %v666
    %v721 = vpack.c.b16 %v671, %v669
    %v722 = vpack.c.b16 %v672, %v670
    %v723 = vpack.c.b16 %v675, %v673
    %v724 = vpack.c.b16 %v676, %v674
    %v725 = vpack.c.b16 %v679, %v677
    %v726 = vpack.c.b16 %v680, %v678
    %v727 = vpack.c.b16 %v683, %v681
    %v728 = vpack.c.b16 %v684, %v682
    %v729 = vpack.c.b16 %v687, %v685
    %v730 = vpack.c.b16 %v688, %v686
    %v731 = vpack.c.b16 %v691, %v689
    %v732 = vpack.c.b16 %v692, %v690
    %v733 = vpack.c.b16 %v695, %v693
    %v734 = vpack.c.b16 %v696, %v694
    %v735 = vpack.c.b16 %v699, %v697
    %v736 = vpack.c.b16 %v700, %v698
    %v737 = vpack.c.b16 %v703, %v701
    %v738 = vpack.c.b16 %v704, %v702
    %v739 = vpack.c.b16 %v707, %v705
    %v740 = vpack.c.b16 %v708, %v706
    %773 = vmatpush.bf16.msra.mxu0 %v723
    %774 = vmatpush.bf16.msra.mxu0 %v721
    %775 = vmatpush.bf16.msra.mxu0 %v719
    %776 = vmatpush.bf16.msra.mxu0 %v717
    %777 = vmatpush.bf16.msra.mxu0 %v715
    %778 = vmatpush.bf16.msra.mxu0 %v713
    %779 = vmatpush.bf16.msra.mxu0 %v711
    %780 = vmatpush.bf16.msra.mxu0 %v709
    %781 = vmatmul.bf16.gmra.mxu0 %v559
    %v782 = vpop.f32.mrf.mxu0
    %v783 = vadd.f32 %v609, %v782
    %v784 = vpop.f32.mrf.mxu0
    %v785 = vadd.f32 %v609, %v784
    %786 = vmatmul.bf16.gmra.mxu0 %v561
    %v787 = vpop.f32.mrf.mxu0
    %v788 = vadd.f32 %v609, %v787
    %v789 = vpop.f32.mrf.mxu0
    %v790 = vadd.f32 %v609, %v789
    %791 = vmatmul.bf16.gmra.mxu0 %v563
    %v792 = vpop.f32.mrf.mxu0
    %v793 = vadd.f32 %v609, %v792
    %v794 = vpop.f32.mrf.mxu0
    %v795 = vadd.f32 %v609, %v794
    %796 = vmatmul.bf16.gmra.mxu0 %v565
    %v797 = vpop.f32.mrf.mxu0
    %v798 = vadd.f32 %v609, %v797
    %v799 = vpop.f32.mrf.mxu0
    %v800 = vadd.f32 %v609, %v799
    %801 = vmatmul.bf16.gmra.mxu0 %v567
    %v802 = vpop.f32.mrf.mxu0
    %v803 = vadd.f32 %v609, %v802
    %v804 = vpop.f32.mrf.mxu0
    %v805 = vadd.f32 %v609, %v804
    %806 = vmatmul.bf16.gmra.mxu0 %v569
    %v807 = vpop.f32.mrf.mxu0
    %v808 = vadd.f32 %v609, %v807
    %v809 = vpop.f32.mrf.mxu0
    %v810 = vadd.f32 %v609, %v809
    %811 = vmatmul.bf16.gmra.mxu0 %v571
    %v812 = vpop.f32.mrf.mxu0
    %v813 = vadd.f32 %v609, %v812
    %v814 = vpop.f32.mrf.mxu0
    %v815 = vadd.f32 %v609, %v814
    %816 = vmatmul.bf16.gmra.mxu0 %v573
    %v817 = vpop.f32.mrf.mxu0
    %v818 = vadd.f32 %v609, %v817
    %v819 = vpop.f32.mrf.mxu0
    %v820 = vadd.f32 %v609, %v819
    %821 = vdwg.mxu0
    %822 = vmatpush.bf16.msra.mxu0 %v739
    %823 = vmatpush.bf16.msra.mxu0 %v737
    %824 = vmatpush.bf16.msra.mxu0 %v735
    %825 = vmatpush.bf16.msra.mxu0 %v733
    %826 = vmatpush.bf16.msra.mxu0 %v731
    %827 = vmatpush.bf16.msra.mxu0 %v729
    %828 = vmatpush.bf16.msra.mxu0 %v727
    %829 = vmatpush.bf16.msra.mxu0 %v725
    %830 = vmatmul.bf16.gmra.mxu0 %v560
    %v831 = vpop.f32.mrf.mxu0
    %v832 = vadd.f32 %v783, %v831
    %v833 = vpop.f32.mrf.mxu0
    %v834 = vadd.f32 %v785, %v833
    %835 = vmatmul.bf16.gmra.mxu0 %v562
    %v836 = vpop.f32.mrf.mxu0
    %v837 = vadd.f32 %v788, %v836
    %v838 = vpop.f32.mrf.mxu0
    %v839 = vadd.f32 %v790, %v838
    %840 = vmatmul.bf16.gmra.mxu0 %v564
    %v841 = vpop.f32.mrf.mxu0
    %v842 = vadd.f32 %v793, %v841
    %v843 = vpop.f32.mrf.mxu0
    %v844 = vadd.f32 %v795, %v843
    %845 = vmatmul.bf16.gmra.mxu0 %v566
    %v846 = vpop.f32.mrf.mxu0
    %v847 = vadd.f32 %v798, %v846
    %v848 = vpop.f32.mrf.mxu0
    %v849 = vadd.f32 %v800, %v848
    %850 = vmatmul.bf16.gmra.mxu0 %v568
    %v851 = vpop.f32.mrf.mxu0
    %v852 = vadd.f32 %v803, %v851
    %v853 = vpop.f32.mrf.mxu0
    %v854 = vadd.f32 %v805, %v853
    %855 = vmatmul.bf16.gmra.mxu0 %v570
    %v856 = vpop.f32.mrf.mxu0
    %v857 = vadd.f32 %v808, %v856
    %v858 = vpop.f32.mrf.mxu0
    %v859 = vadd.f32 %v810, %v858
    %860 = vmatmul.bf16.gmra.mxu0 %v572
    %v861 = vpop.f32.mrf.mxu0
    %v862 = vadd.f32 %v813, %v861
    %v863 = vpop.f32.mrf.mxu0
    %v864 = vadd.f32 %v815, %v863
    %865 = vmatmul.bf16.gmra.mxu0 %v574
    %v866 = vpop.f32.mrf.mxu0
    %v867 = vadd.f32 %v818, %v866
    %v868 = vpop.f32.mrf.mxu0
    %v869 = vadd.f32 %v820, %v868
    %870 = vdwg.mxu0
    %871 = vmatpush.bf16.msra.mxu0 %v724
    %872 = vmatpush.bf16.msra.mxu0 %v722
    %873 = vmatpush.bf16.msra.mxu0 %v720
    %874 = vmatpush.bf16.msra.mxu0 %v718
    %875 = vmatpush.bf16.msra.mxu0 %v716
    %876 = vmatpush.bf16.msra.mxu0 %v714
    %877 = vmatpush.bf16.msra.mxu0 %v712
    %878 = vmatpush.bf16.msra.mxu0 %v710
    %879 = vmatmul.bf16.gmra.mxu0 %v559
    %v880 = vpop.f32.mrf.mxu0
    %v881 = vadd.f32 %v610, %v880
    %v882 = vpop.f32.mrf.mxu0
    %v883 = vadd.f32 %v610, %v882
    %884 = vmatmul.bf16.gmra.mxu0 %v561
    %v885 = vpop.f32.mrf.mxu0
    %v886 = vadd.f32 %v610, %v885
    %v887 = vpop.f32.mrf.mxu0
    %v888 = vadd.f32 %v610, %v887
    %889 = vmatmul.bf16.gmra.mxu0 %v563
    %v890 = vpop.f32.mrf.mxu0
    %v891 = vadd.f32 %v610, %v890
    %v892 = vpop.f32.mrf.mxu0
    %v893 = vadd.f32 %v610, %v892
    %894 = vmatmul.bf16.gmra.mxu0 %v565
    %v895 = vpop.f32.mrf.mxu0
    %v896 = vadd.f32 %v610, %v895
    %v897 = vpop.f32.mrf.mxu0
    %v898 = vadd.f32 %v610, %v897
    %899 = vmatmul.bf16.gmra.mxu0 %v567
    %v900 = vpop.f32.mrf.mxu0
    %v901 = vadd.f32 %v610, %v900
    %v902 = vpop.f32.mrf.mxu0
    %v903 = vadd.f32 %v610, %v902
    %904 = vmatmul.bf16.gmra.mxu0 %v569
    %v905 = vpop.f32.mrf.mxu0
    %v906 = vadd.f32 %v610, %v905
    %v907 = vpop.f32.mrf.mxu0
    %v908 = vadd.f32 %v610, %v907
    %909 = vmatmul.bf16.gmra.mxu0 %v571
    %v910 = vpop.f32.mrf.mxu0
    %v911 = vadd.f32 %v610, %v910
    %v912 = vpop.f32.mrf.mxu0
    %v913 = vadd.f32 %v610, %v912
    %914 = vmatmul.bf16.gmra.mxu0 %v573
    %v915 = vpop.f32.mrf.mxu0
    %v916 = vadd.f32 %v610, %v915
    %v917 = vpop.f32.mrf.mxu0
    %v918 = vadd.f32 %v610, %v917
    %919 = vdwg.mxu0
    %920 = vmatpush.bf16.msra.mxu0 %v740
    %921 = vmatpush.bf16.msra.mxu0 %v738
    %922 = vmatpush.bf16.msra.mxu0 %v736
    %923 = vmatpush.bf16.msra.mxu0 %v734
    %924 = vmatpush.bf16.msra.mxu0 %v732
    %925 = vmatpush.bf16.msra.mxu0 %v730
    %926 = vmatpush.bf16.msra.mxu0 %v728
    %927 = vmatpush.bf16.msra.mxu0 %v726
    %928 = vmatmul.bf16.gmra.mxu0 %v560
    %v929 = vpop.f32.mrf.mxu0
    %v930 = vadd.f32 %v881, %v929
    %v931 = vpop.f32.mrf.mxu0
    %v932 = vadd.f32 %v883, %v931
    %933 = vmatmul.bf16.gmra.mxu0 %v562
    %v934 = vpop.f32.mrf.mxu0
    %v935 = vadd.f32 %v886, %v934
    %v936 = vpop.f32.mrf.mxu0
    %v937 = vadd.f32 %v888, %v936
    %938 = vmatmul.bf16.gmra.mxu0 %v564
    %v939 = vpop.f32.mrf.mxu0
    %v940 = vadd.f32 %v891, %v939
    %v941 = vpop.f32.mrf.mxu0
    %v942 = vadd.f32 %v893, %v941
    %943 = vmatmul.bf16.gmra.mxu0 %v566
    %v944 = vpop.f32.mrf.mxu0
    %v945 = vadd.f32 %v896, %v944
    %v946 = vpop.f32.mrf.mxu0
    %v947 = vadd.f32 %v898, %v946
    %948 = vmatmul.bf16.gmra.mxu0 %v568
    %v949 = vpop.f32.mrf.mxu0
    %v950 = vadd.f32 %v901, %v949
    %v951 = vpop.f32.mrf.mxu0
    %v952 = vadd.f32 %v903, %v951
    %953 = vmatmul.bf16.gmra.mxu0 %v570
    %v954 = vpop.f32.mrf.mxu0
    %v955 = vadd.f32 %v906, %v954
    %v956 = vpop.f32.mrf.mxu0
    %v957 = vadd.f32 %v908, %v956
    %958 = vmatmul.bf16.gmra.mxu0 %v572
    %v959 = vpop.f32.mrf.mxu0
    %v960 = vadd.f32 %v911, %v959
    %v961 = vpop.f32.mrf.mxu0
    %v962 = vadd.f32 %v913, %v961
    %963 = vmatmul.bf16.gmra.mxu0 %v574
    %v964 = vpop.f32.mrf.mxu0
    %v965 = vadd.f32 %v916, %v964
    %v966 = vpop.f32.mrf.mxu0
    %v967 = vadd.f32 %v918, %v966
    %968 = vdwg.mxu0
    %v969 = vsub.f32 0.0, %v832
    %v970 = vsub.f32 0.0, %v930
    %v971 = vsub.f32 0.0, %v834
    %v972 = vsub.f32 0.0, %v932
    %v973 = vsub.f32 0.0, %v837
    %v974 = vsub.f32 0.0, %v935
    %v975 = vsub.f32 0.0, %v839
    %v976 = vsub.f32 0.0, %v937
    %v977 = vsub.f32 0.0, %v842
    %v978 = vsub.f32 0.0, %v940
    %v979 = vsub.f32 0.0, %v844
    %v980 = vsub.f32 0.0, %v942
    %v981 = vsub.f32 0.0, %v847
    %v982 = vsub.f32 0.0, %v945
    %v983 = vsub.f32 0.0, %v849
    %v984 = vsub.f32 0.0, %v947
    %v985 = vsub.f32 0.0, %v852
    %v986 = vsub.f32 0.0, %v950
    %v987 = vsub.f32 0.0, %v854
    %v988 = vsub.f32 0.0, %v952
    %v989 = vsub.f32 0.0, %v857
    %v990 = vsub.f32 0.0, %v955
    %v991 = vsub.f32 0.0, %v859
    %v992 = vsub.f32 0.0, %v957
    %v993 = vsub.f32 0.0, %v862
    %v994 = vsub.f32 0.0, %v960
    %v995 = vsub.f32 0.0, %v864
    %v996 = vsub.f32 0.0, %v962
    %v997 = vsub.f32 0.0, %v867
    %v998 = vsub.f32 0.0, %v965
    %v999 = vsub.f32 0.0, %v869
    %v1000 = vsub.f32 0.0, %v967
    %v1001 = vmul.f32 %v969, 1.442695
    %v1002 = vpow.pop %v1001
    %v1003 = vmul.f32 %v970, 1.442695
    %v1004 = vpow.pop %v1003
    %v1005 = vmul.f32 %v971, 1.442695
    %v1006 = vpow.pop %v1005
    %v1007 = vmul.f32 %v972, 1.442695
    %v1008 = vpow.pop %v1007
    %v1009 = vmul.f32 %v973, 1.442695
    %v1010 = vpow.pop %v1009
    %v1011 = vmul.f32 %v974, 1.442695
    %v1012 = vpow.pop %v1011
    %v1013 = vmul.f32 %v975, 1.442695
    %v1014 = vpow.pop %v1013
    %v1015 = vmul.f32 %v976, 1.442695
    %v1016 = vpow.pop %v1015
    %v1017 = vmul.f32 %v977, 1.442695
    %v1018 = vpow.pop %v1017
    %v1019 = vmul.f32 %v978, 1.442695
    %v1020 = vpow.pop %v1019
    %v1021 = vmul.f32 %v979, 1.442695
    %v1022 = vpow.pop %v1021
    %v1023 = vmul.f32 %v980, 1.442695
    %v1024 = vpow.pop %v1023
    %v1025 = vmul.f32 %v981, 1.442695
    %v1026 = vpow.pop %v1025
    %v1027 = vmul.f32 %v982, 1.442695
    %v1028 = vpow.pop %v1027
    %v1029 = vmul.f32 %v983, 1.442695
    %v1030 = vpow.pop %v1029
    %v1031 = vmul.f32 %v984, 1.442695
    %v1032 = vpow.pop %v1031
    %v1033 = vmul.f32 %v985, 1.442695
    %v1034 = vpow.pop %v1033
    %v1035 = vmul.f32 %v986, 1.442695
    %v1036 = vpow.pop %v1035
    %v1037 = vmul.f32 %v987, 1.442695
    %v1038 = vpow.pop %v1037
    %v1039 = vmul.f32 %v988, 1.442695
    %v1040 = vpow.pop %v1039
    %v1041 = vmul.f32 %v989, 1.442695
    %v1042 = vpow.pop %v1041
    %v1043 = vmul.f32 %v990, 1.442695
    %v1044 = vpow.pop %v1043
    %v1045 = vmul.f32 %v991, 1.442695
    %v1046 = vpow.pop %v1045
    %v1047 = vmul.f32 %v992, 1.442695
    %v1048 = vpow.pop %v1047
    %v1049 = vmul.f32 %v993, 1.442695
    %v1050 = vpow.pop %v1049
    %v1051 = vmul.f32 %v994, 1.442695
    %v1052 = vpow.pop %v1051
    %v1053 = vmul.f32 %v995, 1.442695
    %v1054 = vpow.pop %v1053
    %v1055 = vmul.f32 %v996, 1.442695
    %v1056 = vpow.pop %v1055
    %v1057 = vmul.f32 %v997, 1.442695
    %v1058 = vpow.pop %v1057
    %v1059 = vmul.f32 %v998, 1.442695
    %v1060 = vpow.pop %v1059
    %v1061 = vmul.f32 %v999, 1.442695
    %v1062 = vpow.pop %v1061
    %v1063 = vmul.f32 %v1000, 1.442695
    %v1064 = vpow.pop %v1063
    %v1065 = vadd.f32 %v1002, 1.0
    %v1066 = vadd.f32 %v1004, 1.0
    %v1067 = vadd.f32 %v1006, 1.0
    %v1068 = vadd.f32 %v1008, 1.0
    %v1069 = vadd.f32 %v1010, 1.0
    %v1070 = vadd.f32 %v1012, 1.0
    %v1071 = vadd.f32 %v1014, 1.0
    %v1072 = vadd.f32 %v1016, 1.0
    %v1073 = vadd.f32 %v1018, 1.0
    %v1074 = vadd.f32 %v1020, 1.0
    %v1075 = vadd.f32 %v1022, 1.0
    %v1076 = vadd.f32 %v1024, 1.0
    %v1077 = vadd.f32 %v1026, 1.0
    %v1078 = vadd.f32 %v1028, 1.0
    %v1079 = vadd.f32 %v1030, 1.0
    %v1080 = vadd.f32 %v1032, 1.0
    %v1081 = vadd.f32 %v1034, 1.0
    %v1082 = vadd.f32 %v1036, 1.0
    %v1083 = vadd.f32 %v1038, 1.0
    %v1084 = vadd.f32 %v1040, 1.0
    %v1085 = vadd.f32 %v1042, 1.0
    %v1086 = vadd.f32 %v1044, 1.0
    %v1087 = vadd.f32 %v1046, 1.0
    %v1088 = vadd.f32 %v1048, 1.0
    %v1089 = vadd.f32 %v1050, 1.0
    %v1090 = vadd.f32 %v1052, 1.0
    %v1091 = vadd.f32 %v1054, 1.0
    %v1092 = vadd.f32 %v1056, 1.0
    %v1093 = vadd.f32 %v1058, 1.0
    %v1094 = vadd.f32 %v1060, 1.0
    %v1095 = vadd.f32 %v1062, 1.0
    %v1096 = vadd.f32 %v1064, 1.0
    %v1097 = vrcp.pop %v1065
    %v1098 = vrcp.pop %v1066
    %v1099 = vrcp.pop %v1067
    %v1100 = vrcp.pop %v1068
    %v1101 = vrcp.pop %v1069
    %v1102 = vrcp.pop %v1070
    %v1103 = vrcp.pop %v1071
    %v1104 = vrcp.pop %v1072
    %v1105 = vrcp.pop %v1073
    %v1106 = vrcp.pop %v1074
    %v1107 = vrcp.pop %v1075
    %v1108 = vrcp.pop %v1076
    %v1109 = vrcp.pop %v1077
    %v1110 = vrcp.pop %v1078
    %v1111 = vrcp.pop %v1079
    %v1112 = vrcp.pop %v1080
    %v1113 = vrcp.pop %v1081
    %v1114 = vrcp.pop %v1082
    %v1115 = vrcp.pop %v1083
    %v1116 = vrcp.pop %v1084
    %v1117 = vrcp.pop %v1085
    %v1118 = vrcp.pop %v1086
    %v1119 = vrcp.pop %v1087
    %v1120 = vrcp.pop %v1088
    %v1121 = vrcp.pop %v1089
    %v1122 = vrcp.pop %v1090
    %v1123 = vrcp.pop %v1091
    %v1124 = vrcp.pop %v1092
    %v1125 = vrcp.pop %v1093
    %v1126 = vrcp.pop %v1094
    %v1127 = vrcp.pop %v1095
    %v1128 = vrcp.pop %v1096
    %v1129 = vmul.f32 %v832, %v1097
    %v1130 = vmul.f32 %v930, %v1098
    %v1131 = vmul.f32 %v834, %v1099
    %v1132 = vmul.f32 %v932, %v1100
    %v1133 = vmul.f32 %v837, %v1101
    %v1134 = vmul.f32 %v935, %v1102
    %v1135 = vmul.f32 %v839, %v1103
    %v1136 = vmul.f32 %v937, %v1104
    %v1137 = vmul.f32 %v842, %v1105
    %v1138 = vmul.f32 %v940, %v1106
    %v1139 = vmul.f32 %v844, %v1107
    %v1140 = vmul.f32 %v942, %v1108
    %v1141 = vmul.f32 %v847, %v1109
    %v1142 = vmul.f32 %v945, %v1110
    %v1143 = vmul.f32 %v849, %v1111
    %v1144 = vmul.f32 %v947, %v1112
    %v1145 = vmul.f32 %v852, %v1113
    %v1146 = vmul.f32 %v950, %v1114
    %v1147 = vmul.f32 %v854, %v1115
    %v1148 = vmul.f32 %v952, %v1116
    %v1149 = vmul.f32 %v857, %v1117
    %v1150 = vmul.f32 %v955, %v1118
    %v1151 = vmul.f32 %v859, %v1119
    %v1152 = vmul.f32 %v957, %v1120
    %v1153 = vmul.f32 %v862, %v1121
    %v1154 = vmul.f32 %v960, %v1122
    %v1155 = vmul.f32 %v864, %v1123
    %v1156 = vmul.f32 %v962, %v1124
    %v1157 = vmul.f32 %v867, %v1125
    %v1158 = vmul.f32 %v965, %v1126
    %v1159 = vmul.f32 %v869, %v1127
    %v1160 = vmul.f32 %v967, %v1128
    %v1161 = vpack.c.bf16 %v1131, %v1129
    %v1162 = vpack.c.bf16 %v1132, %v1130
    %v1163 = vpack.c.bf16 %v1135, %v1133
    %v1164 = vpack.c.bf16 %v1136, %v1134
    %v1165 = vpack.c.bf16 %v1139, %v1137
    %v1166 = vpack.c.bf16 %v1140, %v1138
    %v1167 = vpack.c.bf16 %v1143, %v1141
    %v1168 = vpack.c.bf16 %v1144, %v1142
    %v1169 = vpack.c.bf16 %v1147, %v1145
    %v1170 = vpack.c.bf16 %v1148, %v1146
    %v1171 = vpack.c.bf16 %v1151, %v1149
    %v1172 = vpack.c.bf16 %v1152, %v1150
    %v1173 = vpack.c.bf16 %v1155, %v1153
    %v1174 = vpack.c.bf16 %v1156, %v1154
    %v1175 = vpack.c.bf16 %v1159, %v1157
    %v1176 = vpack.c.bf16 %v1160, %v1158
    %v1177 = vld [vmem:[#allocation10] sm:$0xff]
    %v1178 = vld [vmem:[#allocation10 + $0x8] sm:$0xff]
    %v1179 = vld [vmem:[#allocation10 + $0x10] sm:$0xff]
    %v1180 = vld [vmem:[#allocation10 + $0x18] sm:$0xff]
    %v1181 = vld [vmem:[#allocation10 + $0x20] sm:$0xff]
    %v1182 = vld [vmem:[#allocation10 + $0x28] sm:$0xff]
    %v1183 = vld [vmem:[#allocation10 + $0x30] sm:$0xff]
    %v1184 = vld [vmem:[#allocation10 + $0x38] sm:$0xff]
    %v1185 = vld [vmem:[#allocation10 + $0x40] sm:$0xff]
    %v1186 = vld [vmem:[#allocation10 + $0x48] sm:$0xff]
    %v1187 = vld [vmem:[#allocation10 + $0x50] sm:$0xff]
    %v1188 = vld [vmem:[#allocation10 + $0x58] sm:$0xff]
    %v1189 = vld [vmem:[#allocation10 + $0x60] sm:$0xff]
    %v1190 = vld [vmem:[#allocation10 + $0x68] sm:$0xff]
    %v1191 = vld [vmem:[#allocation10 + $0x70] sm:$0xff]
    %v1192 = vld [vmem:[#allocation10 + $0x78] sm:$0xff]
    %v1193 = vld [vmem:[#allocation10 + $0x80] sm:$0xff]
    %v1194 = vld [vmem:[#allocation10 + $0x88] sm:$0xff]
    %v1195 = vld [vmem:[#allocation10 + $0x90] sm:$0xff]
    %v1196 = vld [vmem:[#allocation10 + $0x98] sm:$0xff]
    %v1197 = vld [vmem:[#allocation10 + $0xa0] sm:$0xff]
    %v1198 = vld [vmem:[#allocation10 + $0xa8] sm:$0xff]
    %v1199 = vld [vmem:[#allocation10 + $0xb0] sm:$0xff]
    %v1200 = vld [vmem:[#allocation10 + $0xb8] sm:$0xff]
    %v1201 = vld [vmem:[#allocation10 + $0xc0] sm:$0xff]
    %v1202 = vld [vmem:[#allocation10 + $0xc8] sm:$0xff]
    %v1203 = vld [vmem:[#allocation10 + $0xd0] sm:$0xff]
    %v1204 = vld [vmem:[#allocation10 + $0xd8] sm:$0xff]
    %v1205 = vld [vmem:[#allocation10 + $0xe0] sm:$0xff]
    %v1206 = vld [vmem:[#allocation10 + $0xe8] sm:$0xff]
    %v1207 = vld [vmem:[#allocation10 + $0xf0] sm:$0xff]
    %v1208 = vld [vmem:[#allocation10 + $0xf8] sm:$0xff]
    %v1209 = vld [vmem:[%s6] sm:$0x3]
    %v1211 = vperm.slane %v1209, 0
    %v1212 = vperm.slane %v1209, 1
    %v1247 = vunpack.c.l.b16 %v1177
    %v1248 = vunpack.c.h.b16 %v1177
    %v1249 = vunpack.c.l.b16 %v1178
    %v1250 = vunpack.c.h.b16 %v1178
    %v1251 = vunpack.c.l.b16 %v1179
    %v1252 = vunpack.c.h.b16 %v1179
    %v1253 = vunpack.c.l.b16 %v1180
    %v1254 = vunpack.c.h.b16 %v1180
    %v1255 = vunpack.c.l.b16 %v1181
    %v1256 = vunpack.c.h.b16 %v1181
    %v1257 = vunpack.c.l.b16 %v1182
    %v1258 = vunpack.c.h.b16 %v1182
    %v1259 = vunpack.c.l.b16 %v1183
    %v1260 = vunpack.c.h.b16 %v1183
    %v1261 = vunpack.c.l.b16 %v1184
    %v1262 = vunpack.c.h.b16 %v1184
    %v1263 = vunpack.c.l.b16 %v1185
    %v1264 = vunpack.c.h.b16 %v1185
    %v1265 = vunpack.c.l.b16 %v1186
    %v1266 = vunpack.c.h.b16 %v1186
    %v1267 = vunpack.c.l.b16 %v1187
    %v1268 = vunpack.c.h.b16 %v1187
    %v1269 = vunpack.c.l.b16 %v1188
    %v1270 = vunpack.c.h.b16 %v1188
    %v1271 = vunpack.c.l.b16 %v1189
    %v1272 = vunpack.c.h.b16 %v1189
    %v1273 = vunpack.c.l.b16 %v1190
    %v1274 = vunpack.c.h.b16 %v1190
    %v1275 = vunpack.c.l.b16 %v1191
    %v1276 = vunpack.c.h.b16 %v1191
    %v1277 = vunpack.c.l.b16 %v1192
    %v1278 = vunpack.c.h.b16 %v1192
    %v1279 = vunpack.c.l.b16 %v1193
    %v1280 = vunpack.c.h.b16 %v1193
    %v1281 = vunpack.c.l.b16 %v1194
    %v1282 = vunpack.c.h.b16 %v1194
    %v1283 = vunpack.c.l.b16 %v1195
    %v1284 = vunpack.c.h.b16 %v1195
    %v1285 = vunpack.c.l.b16 %v1196
    %v1286 = vunpack.c.h.b16 %v1196
    %v1287 = vunpack.c.l.b16 %v1197
    %v1288 = vunpack.c.h.b16 %v1197
    %v1289 = vunpack.c.l.b16 %v1198
    %v1290 = vunpack.c.h.b16 %v1198
    %v1291 = vunpack.c.l.b16 %v1199
    %v1292 = vunpack.c.h.b16 %v1199
    %v1293 = vunpack.c.l.b16 %v1200
    %v1294 = vunpack.c.h.b16 %v1200
    %v1295 = vunpack.c.l.b16 %v1201
    %v1296 = vunpack.c.h.b16 %v1201
    %v1297 = vunpack.c.l.b16 %v1202
    %v1298 = vunpack.c.h.b16 %v1202
    %v1299 = vunpack.c.l.b16 %v1203
    %v1300 = vunpack.c.h.b16 %v1203
    %v1301 = vunpack.c.l.b16 %v1204
    %v1302 = vunpack.c.h.b16 %v1204
    %v1303 = vunpack.c.l.b16 %v1205
    %v1304 = vunpack.c.h.b16 %v1205
    %v1305 = vunpack.c.l.b16 %v1206
    %v1306 = vunpack.c.h.b16 %v1206
    %v1307 = vunpack.c.l.b16 %v1207
    %v1308 = vunpack.c.h.b16 %v1207
    %v1309 = vunpack.c.l.b16 %v1208
    %v1310 = vunpack.c.h.b16 %v1208
    %v1311 = vpack.c.b16 %v1249, %v1247
    %v1312 = vpack.c.b16 %v1250, %v1248
    %v1313 = vpack.c.b16 %v1253, %v1251
    %v1314 = vpack.c.b16 %v1254, %v1252
    %v1315 = vpack.c.b16 %v1257, %v1255
    %v1316 = vpack.c.b16 %v1258, %v1256
    %v1317 = vpack.c.b16 %v1261, %v1259
    %v1318 = vpack.c.b16 %v1262, %v1260
    %v1319 = vpack.c.b16 %v1265, %v1263
    %v1320 = vpack.c.b16 %v1266, %v1264
    %v1321 = vpack.c.b16 %v1269, %v1267
    %v1322 = vpack.c.b16 %v1270, %v1268
    %v1323 = vpack.c.b16 %v1273, %v1271
    %v1324 = vpack.c.b16 %v1274, %v1272
    %v1325 = vpack.c.b16 %v1277, %v1275
    %v1326 = vpack.c.b16 %v1278, %v1276
    %v1327 = vpack.c.b16 %v1281, %v1279
    %v1328 = vpack.c.b16 %v1282, %v1280
    %v1329 = vpack.c.b16 %v1285, %v1283
    %v1330 = vpack.c.b16 %v1286, %v1284
    %v1331 = vpack.c.b16 %v1289, %v1287
    %v1332 = vpack.c.b16 %v1290, %v1288
    %v1333 = vpack.c.b16 %v1293, %v1291
    %v1334 = vpack.c.b16 %v1294, %v1292
    %v1335 = vpack.c.b16 %v1297, %v1295
    %v1336 = vpack.c.b16 %v1298, %v1296
    %v1337 = vpack.c.b16 %v1301, %v1299
    %v1338 = vpack.c.b16 %v1302, %v1300
    %v1339 = vpack.c.b16 %v1305, %v1303
    %v1340 = vpack.c.b16 %v1306, %v1304
    %v1341 = vpack.c.b16 %v1309, %v1307
    %v1342 = vpack.c.b16 %v1310, %v1308
    %1375 = vmatpush.bf16.msra.mxu0 %v1325
    %1376 = vmatpush.bf16.msra.mxu0 %v1323
    %1377 = vmatpush.bf16.msra.mxu0 %v1321
    %1378 = vmatpush.bf16.msra.mxu0 %v1319
    %1379 = vmatpush.bf16.msra.mxu0 %v1317
    %1380 = vmatpush.bf16.msra.mxu0 %v1315
    %1381 = vmatpush.bf16.msra.mxu0 %v1313
    %1382 = vmatpush.bf16.msra.mxu0 %v1311
    %1383 = vmatmul.bf16.gmra.mxu0 %v1161
    %v1384 = vpop.f32.mrf.mxu0
    %v1385 = vadd.f32 %v1211, %v1384
    %v1386 = vpop.f32.mrf.mxu0
    %v1387 = vadd.f32 %v1211, %v1386
    %1388 = vmatmul.bf16.gmra.mxu0 %v1163
    %v1389 = vpop.f32.mrf.mxu0
    %v1390 = vadd.f32 %v1211, %v1389
    %v1391 = vpop.f32.mrf.mxu0
    %v1392 = vadd.f32 %v1211, %v1391
    %1393 = vmatmul.bf16.gmra.mxu0 %v1165
    %v1394 = vpop.f32.mrf.mxu0
    %v1395 = vadd.f32 %v1211, %v1394
    %v1396 = vpop.f32.mrf.mxu0
    %v1397 = vadd.f32 %v1211, %v1396
    %1398 = vmatmul.bf16.gmra.mxu0 %v1167
    %v1399 = vpop.f32.mrf.mxu0
    %v1400 = vadd.f32 %v1211, %v1399
    %v1401 = vpop.f32.mrf.mxu0
    %v1402 = vadd.f32 %v1211, %v1401
    %1403 = vmatmul.bf16.gmra.mxu0 %v1169
    %v1404 = vpop.f32.mrf.mxu0
    %v1405 = vadd.f32 %v1211, %v1404
    %v1406 = vpop.f32.mrf.mxu0
    %v1407 = vadd.f32 %v1211, %v1406
    %1408 = vmatmul.bf16.gmra.mxu0 %v1171
    %v1409 = vpop.f32.mrf.mxu0
    %v1410 = vadd.f32 %v1211, %v1409
    %v1411 = vpop.f32.mrf.mxu0
    %v1412 = vadd.f32 %v1211, %v1411
    %1413 = vmatmul.bf16.gmra.mxu0 %v1173
    %v1414 = vpop.f32.mrf.mxu0
    %v1415 = vadd.f32 %v1211, %v1414
    %v1416 = vpop.f32.mrf.mxu0
    %v1417 = vadd.f32 %v1211, %v1416
    %1418 = vmatmul.bf16.gmra.mxu0 %v1175
    %v1419 = vpop.f32.mrf.mxu0
    %v1420 = vadd.f32 %v1211, %v1419
    %v1421 = vpop.f32.mrf.mxu0
    %v1422 = vadd.f32 %v1211, %v1421
    %1423 = vdwg.mxu0
    %1424 = vmatpush.bf16.msra.mxu0 %v1341
    %1425 = vmatpush.bf16.msra.mxu0 %v1339
    %1426 = vmatpush.bf16.msra.mxu0 %v1337
    %1427 = vmatpush.bf16.msra.mxu0 %v1335
    %1428 = vmatpush.bf16.msra.mxu0 %v1333
    %1429 = vmatpush.bf16.msra.mxu0 %v1331
    %1430 = vmatpush.bf16.msra.mxu0 %v1329
    %1431 = vmatpush.bf16.msra.mxu0 %v1327
    %1432 = vmatmul.bf16.gmra.mxu0 %v1162
    %v1433 = vpop.f32.mrf.mxu0
    %v1434 = vadd.f32 %v1385, %v1433
    %v1435 = vpop.f32.mrf.mxu0
    %v1436 = vadd.f32 %v1387, %v1435
    %1437 = vmatmul.bf16.gmra.mxu0 %v1164
    %v1438 = vpop.f32.mrf.mxu0
    %v1439 = vadd.f32 %v1390, %v1438
    %v1440 = vpop.f32.mrf.mxu0
    %v1441 = vadd.f32 %v1392, %v1440
    %1442 = vmatmul.bf16.gmra.mxu0 %v1166
    %v1443 = vpop.f32.mrf.mxu0
    %v1444 = vadd.f32 %v1395, %v1443
    %v1445 = vpop.f32.mrf.mxu0
    %v1446 = vadd.f32 %v1397, %v1445
    %1447 = vmatmul.bf16.gmra.mxu0 %v1168
    %v1448 = vpop.f32.mrf.mxu0
    %v1449 = vadd.f32 %v1400, %v1448
    %v1450 = vpop.f32.mrf.mxu0
    %v1451 = vadd.f32 %v1402, %v1450
    %1452 = vmatmul.bf16.gmra.mxu0 %v1170
    %v1453 = vpop.f32.mrf.mxu0
    %v1454 = vadd.f32 %v1405, %v1453
    %v1455 = vpop.f32.mrf.mxu0
    %v1456 = vadd.f32 %v1407, %v1455
    %1457 = vmatmul.bf16.gmra.mxu0 %v1172
    %v1458 = vpop.f32.mrf.mxu0
    %v1459 = vadd.f32 %v1410, %v1458
    %v1460 = vpop.f32.mrf.mxu0
    %v1461 = vadd.f32 %v1412, %v1460
    %1462 = vmatmul.bf16.gmra.mxu0 %v1174
    %v1463 = vpop.f32.mrf.mxu0
    %v1464 = vadd.f32 %v1415, %v1463
    %v1465 = vpop.f32.mrf.mxu0
    %v1466 = vadd.f32 %v1417, %v1465
    %1467 = vmatmul.bf16.gmra.mxu0 %v1176
    %v1468 = vpop.f32.mrf.mxu0
    %v1469 = vadd.f32 %v1420, %v1468
    %v1470 = vpop.f32.mrf.mxu0
    %v1471 = vadd.f32 %v1422, %v1470
    %1472 = vdwg.mxu0
    %1473 = vmatpush.bf16.msra.mxu0 %v1326
    %1474 = vmatpush.bf16.msra.mxu0 %v1324
    %1475 = vmatpush.bf16.msra.mxu0 %v1322
    %1476 = vmatpush.bf16.msra.mxu0 %v1320
    %1477 = vmatpush.bf16.msra.mxu0 %v1318
    %1478 = vmatpush.bf16.msra.mxu0 %v1316
    %1479 = vmatpush.bf16.msra.mxu0 %v1314
    %1480 = vmatpush.bf16.msra.mxu0 %v1312
    %1481 = vmatmul.bf16.gmra.mxu0 %v1161
    %v1482 = vpop.f32.mrf.mxu0
    %v1483 = vadd.f32 %v1212, %v1482
    %v1484 = vpop.f32.mrf.mxu0
    %v1485 = vadd.f32 %v1212, %v1484
    %1486 = vmatmul.bf16.gmra.mxu0 %v1163
    %v1487 = vpop.f32.mrf.mxu0
    %v1488 = vadd.f32 %v1212, %v1487
    %v1489 = vpop.f32.mrf.mxu0
    %v1490 = vadd.f32 %v1212, %v1489
    %1491 = vmatmul.bf16.gmra.mxu0 %v1165
    %v1492 = vpop.f32.mrf.mxu0
    %v1493 = vadd.f32 %v1212, %v1492
    %v1494 = vpop.f32.mrf.mxu0
    %v1495 = vadd.f32 %v1212, %v1494
    %1496 = vmatmul.bf16.gmra.mxu0 %v1167
    %v1497 = vpop.f32.mrf.mxu0
    %v1498 = vadd.f32 %v1212, %v1497
    %v1499 = vpop.f32.mrf.mxu0
    %v1500 = vadd.f32 %v1212, %v1499
    %1501 = vmatmul.bf16.gmra.mxu0 %v1169
    %v1502 = vpop.f32.mrf.mxu0
    %v1503 = vadd.f32 %v1212, %v1502
    %v1504 = vpop.f32.mrf.mxu0
    %v1505 = vadd.f32 %v1212, %v1504
    %1506 = vmatmul.bf16.gmra.mxu0 %v1171
    %v1507 = vpop.f32.mrf.mxu0
    %v1508 = vadd.f32 %v1212, %v1507
    %v1509 = vpop.f32.mrf.mxu0
    %v1510 = vadd.f32 %v1212, %v1509
    %1511 = vmatmul.bf16.gmra.mxu0 %v1173
    %v1512 = vpop.f32.mrf.mxu0
    %v1513 = vadd.f32 %v1212, %v1512
    %v1514 = vpop.f32.mrf.mxu0
    %v1515 = vadd.f32 %v1212, %v1514
    %1516 = vmatmul.bf16.gmra.mxu0 %v1175
    %v1517 = vpop.f32.mrf.mxu0
    %v1518 = vadd.f32 %v1212, %v1517
    %v1519 = vpop.f32.mrf.mxu0
    %v1520 = vadd.f32 %v1212, %v1519
    %1521 = vdwg.mxu0
    %1522 = vmatpush.bf16.msra.mxu0 %v1342
    %1523 = vmatpush.bf16.msra.mxu0 %v1340
    %1524 = vmatpush.bf16.msra.mxu0 %v1338
    %1525 = vmatpush.bf16.msra.mxu0 %v1336
    %1526 = vmatpush.bf16.msra.mxu0 %v1334
    %1527 = vmatpush.bf16.msra.mxu0 %v1332
    %1528 = vmatpush.bf16.msra.mxu0 %v1330
    %1529 = vmatpush.bf16.msra.mxu0 %v1328
    %1530 = vmatmul.bf16.gmra.mxu0 %v1162
    %v1531 = vpop.f32.mrf.mxu0
    %v1532 = vadd.f32 %v1483, %v1531
    %v1533 = vpop.f32.mrf.mxu0
    %v1534 = vadd.f32 %v1485, %v1533
    %1535 = vmatmul.bf16.gmra.mxu0 %v1164
    %v1536 = vpop.f32.mrf.mxu0
    %v1537 = vadd.f32 %v1488, %v1536
    %v1538 = vpop.f32.mrf.mxu0
    %v1539 = vadd.f32 %v1490, %v1538
    %1540 = vmatmul.bf16.gmra.mxu0 %v1166
    %v1541 = vpop.f32.mrf.mxu0
    %v1542 = vadd.f32 %v1493, %v1541
    %v1543 = vpop.f32.mrf.mxu0
    %v1544 = vadd.f32 %v1495, %v1543
    %1545 = vmatmul.bf16.gmra.mxu0 %v1168
    %v1546 = vpop.f32.mrf.mxu0
    %v1547 = vadd.f32 %v1498, %v1546
    %v1548 = vpop.f32.mrf.mxu0
    %v1549 = vadd.f32 %v1500, %v1548
    %1550 = vmatmul.bf16.gmra.mxu0 %v1170
    %v1551 = vpop.f32.mrf.mxu0
    %v1552 = vadd.f32 %v1503, %v1551
    %v1553 = vpop.f32.mrf.mxu0
    %v1554 = vadd.f32 %v1505, %v1553
    %1555 = vmatmul.bf16.gmra.mxu0 %v1172
    %v1556 = vpop.f32.mrf.mxu0
    %v1557 = vadd.f32 %v1508, %v1556
    %v1558 = vpop.f32.mrf.mxu0
    %v1559 = vadd.f32 %v1510, %v1558
    %1560 = vmatmul.bf16.gmra.mxu0 %v1174
    %v1561 = vpop.f32.mrf.mxu0
    %v1562 = vadd.f32 %v1513, %v1561
    %v1563 = vpop.f32.mrf.mxu0
    %v1564 = vadd.f32 %v1515, %v1563
    %1565 = vmatmul.bf16.gmra.mxu0 %v1176
    %v1566 = vpop.f32.mrf.mxu0
    %v1567 = vadd.f32 %v1518, %v1566
    %v1568 = vpop.f32.mrf.mxu0
    %v1569 = vadd.f32 %v1520, %v1568
    %1570 = vdwg.mxu0
    %v1571 = vsub.f32 0.0, %v1434
    %v1572 = vsub.f32 0.0, %v1532
    %v1573 = vsub.f32 0.0, %v1436
    %v1574 = vsub.f32 0.0, %v1534
    %v1575 = vsub.f32 0.0, %v1439
    %v1576 = vsub.f32 0.0, %v1537
    %v1577 = vsub.f32 0.0, %v1441
    %v1578 = vsub.f32 0.0, %v1539
    %v1579 = vsub.f32 0.0, %v1444
    %v1580 = vsub.f32 0.0, %v1542
    %v1581 = vsub.f32 0.0, %v1446
    %v1582 = vsub.f32 0.0, %v1544
    %v1583 = vsub.f32 0.0, %v1449
    %v1584 = vsub.f32 0.0, %v1547
    %v1585 = vsub.f32 0.0, %v1451
    %v1586 = vsub.f32 0.0, %v1549
    %v1587 = vsub.f32 0.0, %v1454
    %v1588 = vsub.f32 0.0, %v1552
    %v1589 = vsub.f32 0.0, %v1456
    %v1590 = vsub.f32 0.0, %v1554
    %v1591 = vsub.f32 0.0, %v1459
    %v1592 = vsub.f32 0.0, %v1557
    %v1593 = vsub.f32 0.0, %v1461
    %v1594 = vsub.f32 0.0, %v1559
    %v1595 = vsub.f32 0.0, %v1464
    %v1596 = vsub.f32 0.0, %v1562
    %v1597 = vsub.f32 0.0, %v1466
    %v1598 = vsub.f32 0.0, %v1564
    %v1599 = vsub.f32 0.0, %v1469
    %v1600 = vsub.f32 0.0, %v1567
    %v1601 = vsub.f32 0.0, %v1471
    %v1602 = vsub.f32 0.0, %v1569
    %v1603 = vmul.f32 %v1571, 1.442695
    %v1604 = vpow.pop %v1603
    %v1605 = vmul.f32 %v1572, 1.442695
    %v1606 = vpow.pop %v1605
    %v1607 = vmul.f32 %v1573, 1.442695
    %v1608 = vpow.pop %v1607
    %v1609 = vmul.f32 %v1574, 1.442695
    %v1610 = vpow.pop %v1609
    %v1611 = vmul.f32 %v1575, 1.442695
    %v1612 = vpow.pop %v1611
    %v1613 = vmul.f32 %v1576, 1.442695
    %v1614 = vpow.pop %v1613
    %v1615 = vmul.f32 %v1577, 1.442695
    %v1616 = vpow.pop %v1615
    %v1617 = vmul.f32 %v1578, 1.442695
    %v1618 = vpow.pop %v1617
    %v1619 = vmul.f32 %v1579, 1.442695
    %v1620 = vpow.pop %v1619
    %v1621 = vmul.f32 %v1580, 1.442695
    %v1622 = vpow.pop %v1621
    %v1623 = vmul.f32 %v1581, 1.442695
    %v1624 = vpow.pop %v1623
    %v1625 = vmul.f32 %v1582, 1.442695
    %v1626 = vpow.pop %v1625
    %v1627 = vmul.f32 %v1583, 1.442695
    %v1628 = vpow.pop %v1627
    %v1629 = vmul.f32 %v1584, 1.442695
    %v1630 = vpow.pop %v1629
    %v1631 = vmul.f32 %v1585, 1.442695
    %v1632 = vpow.pop %v1631
    %v1633 = vmul.f32 %v1586, 1.442695
    %v1634 = vpow.pop %v1633
    %v1635 = vmul.f32 %v1587, 1.442695
    %v1636 = vpow.pop %v1635
    %v1637 = vmul.f32 %v1588, 1.442695
    %v1638 = vpow.pop %v1637
    %v1639 = vmul.f32 %v1589, 1.442695
    %v1640 = vpow.pop %v1639
    %v1641 = vmul.f32 %v1590, 1.442695
    %v1642 = vpow.pop %v1641
    %v1643 = vmul.f32 %v1591, 1.442695
    %v1644 = vpow.pop %v1643
    %v1645 = vmul.f32 %v1592, 1.442695
    %v1646 = vpow.pop %v1645
    %v1647 = vmul.f32 %v1593, 1.442695
    %v1648 = vpow.pop %v1647
    %v1649 = vmul.f32 %v1594, 1.442695
    %v1650 = vpow.pop %v1649
    %v1651 = vmul.f32 %v1595, 1.442695
    %v1652 = vpow.pop %v1651
    %v1653 = vmul.f32 %v1596, 1.442695
    %v1654 = vpow.pop %v1653
    %v1655 = vmul.f32 %v1597, 1.442695
    %v1656 = vpow.pop %v1655
    %v1657 = vmul.f32 %v1598, 1.442695
    %v1658 = vpow.pop %v1657
    %v1659 = vmul.f32 %v1599, 1.442695
    %v1660 = vpow.pop %v1659
    %v1661 = vmul.f32 %v1600, 1.442695
    %v1662 = vpow.pop %v1661
    %v1663 = vmul.f32 %v1601, 1.442695
    %v1664 = vpow.pop %v1663
    %v1665 = vmul.f32 %v1602, 1.442695
    %v1666 = vpow.pop %v1665
    %v1667 = vadd.f32 %v1604, 1.0
    %v1668 = vadd.f32 %v1606, 1.0
    %v1669 = vadd.f32 %v1608, 1.0
    %v1670 = vadd.f32 %v1610, 1.0
    %v1671 = vadd.f32 %v1612, 1.0
    %v1672 = vadd.f32 %v1614, 1.0
    %v1673 = vadd.f32 %v1616, 1.0
    %v1674 = vadd.f32 %v1618, 1.0
    %v1675 = vadd.f32 %v1620, 1.0
    %v1676 = vadd.f32 %v1622, 1.0
    %v1677 = vadd.f32 %v1624, 1.0
    %v1678 = vadd.f32 %v1626, 1.0
    %v1679 = vadd.f32 %v1628, 1.0
    %v1680 = vadd.f32 %v1630, 1.0
    %v1681 = vadd.f32 %v1632, 1.0
    %v1682 = vadd.f32 %v1634, 1.0
    %v1683 = vadd.f32 %v1636, 1.0
    %v1684 = vadd.f32 %v1638, 1.0
    %v1685 = vadd.f32 %v1640, 1.0
    %v1686 = vadd.f32 %v1642, 1.0
    %v1687 = vadd.f32 %v1644, 1.0
    %v1688 = vadd.f32 %v1646, 1.0
    %v1689 = vadd.f32 %v1648, 1.0
    %v1690 = vadd.f32 %v1650, 1.0
    %v1691 = vadd.f32 %v1652, 1.0
    %v1692 = vadd.f32 %v1654, 1.0
    %v1693 = vadd.f32 %v1656, 1.0
    %v1694 = vadd.f32 %v1658, 1.0
    %v1695 = vadd.f32 %v1660, 1.0
    %v1696 = vadd.f32 %v1662, 1.0
    %v1697 = vadd.f32 %v1664, 1.0
    %v1698 = vadd.f32 %v1666, 1.0
    %v1699 = vrcp.pop %v1667
    %v1700 = vrcp.pop %v1668
    %v1701 = vrcp.pop %v1669
    %v1702 = vrcp.pop %v1670
    %v1703 = vrcp.pop %v1671
    %v1704 = vrcp.pop %v1672
    %v1705 = vrcp.pop %v1673
    %v1706 = vrcp.pop %v1674
    %v1707 = vrcp.pop %v1675
    %v1708 = vrcp.pop %v1676
    %v1709 = vrcp.pop %v1677
    %v1710 = vrcp.pop %v1678
    %v1711 = vrcp.pop %v1679
    %v1712 = vrcp.pop %v1680
    %v1713 = vrcp.pop %v1681
    %v1714 = vrcp.pop %v1682
    %v1715 = vrcp.pop %v1683
    %v1716 = vrcp.pop %v1684
    %v1717 = vrcp.pop %v1685
    %v1718 = vrcp.pop %v1686
    %v1719 = vrcp.pop %v1687
    %v1720 = vrcp.pop %v1688
    %v1721 = vrcp.pop %v1689
    %v1722 = vrcp.pop %v1690
    %v1723 = vrcp.pop %v1691
    %v1724 = vrcp.pop %v1692
    %v1725 = vrcp.pop %v1693
    %v1726 = vrcp.pop %v1694
    %v1727 = vrcp.pop %v1695
    %v1728 = vrcp.pop %v1696
    %v1729 = vrcp.pop %v1697
    %v1730 = vrcp.pop %v1698
    %v1731 = vmul.f32 %v1434, %v1699
    %v1732 = vmul.f32 %v1532, %v1700
    %v1733 = vmul.f32 %v1436, %v1701
    %v1734 = vmul.f32 %v1534, %v1702
    %v1735 = vmul.f32 %v1439, %v1703
    %v1736 = vmul.f32 %v1537, %v1704
    %v1737 = vmul.f32 %v1441, %v1705
    %v1738 = vmul.f32 %v1539, %v1706
    %v1739 = vmul.f32 %v1444, %v1707
    %v1740 = vmul.f32 %v1542, %v1708
    %v1741 = vmul.f32 %v1446, %v1709
    %v1742 = vmul.f32 %v1544, %v1710
    %v1743 = vmul.f32 %v1449, %v1711
    %v1744 = vmul.f32 %v1547, %v1712
    %v1745 = vmul.f32 %v1451, %v1713
    %v1746 = vmul.f32 %v1549, %v1714
    %v1747 = vmul.f32 %v1454, %v1715
    %v1748 = vmul.f32 %v1552, %v1716
    %v1749 = vmul.f32 %v1456, %v1717
    %v1750 = vmul.f32 %v1554, %v1718
    %v1751 = vmul.f32 %v1459, %v1719
    %v1752 = vmul.f32 %v1557, %v1720
    %v1753 = vmul.f32 %v1461, %v1721
    %v1754 = vmul.f32 %v1559, %v1722
    %v1755 = vmul.f32 %v1464, %v1723
    %v1756 = vmul.f32 %v1562, %v1724
    %v1757 = vmul.f32 %v1466, %v1725
    %v1758 = vmul.f32 %v1564, %v1726
    %v1759 = vmul.f32 %v1469, %v1727
    %v1760 = vmul.f32 %v1567, %v1728
    %v1761 = vmul.f32 %v1471, %v1729
    %v1762 = vmul.f32 %v1569, %v1730
    %v1763 = vmax.f32 %v1731, 0.0
    %v1764 = vmax.f32 %v1732, 0.0
    %v1765 = vmax.f32 %v1733, 0.0
    %v1766 = vmax.f32 %v1734, 0.0
    %v1767 = vmax.f32 %v1735, 0.0
    %v1768 = vmax.f32 %v1736, 0.0
    %v1769 = vmax.f32 %v1737, 0.0
    %v1770 = vmax.f32 %v1738, 0.0
    %v1771 = vmax.f32 %v1739, 0.0
    %v1772 = vmax.f32 %v1740, 0.0
    %v1773 = vmax.f32 %v1741, 0.0
    %v1774 = vmax.f32 %v1742, 0.0
    %v1775 = vmax.f32 %v1743, 0.0
    %v1776 = vmax.f32 %v1744, 0.0
    %v1777 = vmax.f32 %v1745, 0.0
    %v1778 = vmax.f32 %v1746, 0.0
    %v1779 = vmax.f32 %v1747, 0.0
    %v1780 = vmax.f32 %v1748, 0.0
    %v1781 = vmax.f32 %v1749, 0.0
    %v1782 = vmax.f32 %v1750, 0.0
    %v1783 = vmax.f32 %v1751, 0.0
    %v1784 = vmax.f32 %v1752, 0.0
    %v1785 = vmax.f32 %v1753, 0.0
    %v1786 = vmax.f32 %v1754, 0.0
    %v1787 = vmax.f32 %v1755, 0.0
    %v1788 = vmax.f32 %v1756, 0.0
    %v1789 = vmax.f32 %v1757, 0.0
    %v1790 = vmax.f32 %v1758, 0.0
    %v1791 = vmax.f32 %v1759, 0.0
    %v1792 = vmax.f32 %v1760, 0.0
    %v1793 = vmax.f32 %v1761, 0.0
    %v1794 = vmax.f32 %v1762, 0.0
    %1795 = vst [vmem:[#allocation11] sm:$0xff] %v1763
    %1796 = vst [vmem:[#allocation11 + $0x8] sm:$0xff] %v1764
    %1797 = vst [vmem:[#allocation11 + $0x10] sm:$0xff] %v1765
    %1798 = vst [vmem:[#allocation11 + $0x18] sm:$0xff] %v1766
    %1799 = vst [vmem:[#allocation11 + $0x20] sm:$0xff] %v1767
    %1800 = vst [vmem:[#allocation11 + $0x28] sm:$0xff] %v1768
    %1801 = vst [vmem:[#allocation11 + $0x30] sm:$0xff] %v1769
    %1802 = vst [vmem:[#allocation11 + $0x38] sm:$0xff] %v1770
    %1803 = vst [vmem:[#allocation11 + $0x40] sm:$0xff] %v1771
    %1804 = vst [vmem:[#allocation11 + $0x48] sm:$0xff] %v1772
    %1805 = vst [vmem:[#allocation11 + $0x50] sm:$0xff] %v1773
    %1806 = vst [vmem:[#allocation11 + $0x58] sm:$0xff] %v1774
    %1807 = vst [vmem:[#allocation11 + $0x60] sm:$0xff] %v1775
    %1808 = vst [vmem:[#allocation11 + $0x68] sm:$0xff] %v1776
    %1809 = vst [vmem:[#allocation11 + $0x70] sm:$0xff] %v1777
    %1810 = vst [vmem:[#allocation11 + $0x78] sm:$0xff] %v1778
    %1811 = vst [vmem:[#allocation11 + $0x80] sm:$0xff] %v1779
    %1812 = vst [vmem:[#allocation11 + $0x88] sm:$0xff] %v1780
    %1813 = vst [vmem:[#allocation11 + $0x90] sm:$0xff] %v1781
    %1814 = vst [vmem:[#allocation11 + $0x98] sm:$0xff] %v1782
    %1815 = vst [vmem:[#allocation11 + $0xa0] sm:$0xff] %v1783
    %1816 = vst [vmem:[#allocation11 + $0xa8] sm:$0xff] %v1784
    %1817 = vst [vmem:[#allocation11 + $0xb0] sm:$0xff] %v1785
    %1818 = vst [vmem:[#allocation11 + $0xb8] sm:$0xff] %v1786
    %1819 = vst [vmem:[#allocation11 + $0xc0] sm:$0xff] %v1787
    %1820 = vst [vmem:[#allocation11 + $0xc8] sm:$0xff] %v1788
    %1821 = vst [vmem:[#allocation11 + $0xd0] sm:$0xff] %v1789
    %1822 = vst [vmem:[#allocation11 + $0xd8] sm:$0xff] %v1790
    %1823 = vst [vmem:[#allocation11 + $0xe0] sm:$0xff] %v1791
    %1824 = vst [vmem:[#allocation11 + $0xe8] sm:$0xff] %v1792
    %1825 = vst [vmem:[#allocation11 + $0xf0] sm:$0xff] %v1793
    %1826 = vst [vmem:[#allocation11 + $0xf8] sm:$0xff] %v1794
    // Predicated region
    $region50: #{tpu_custom_call.1} parent=1 // pred_check
      _
    $region51: #{tpu_custom_call.1} parent=1 // pred_check_branch
      %1828 = sbr.rel (0) target = $region53
    $region52: #{tpu_custom_call.1} parent=1 // pred_region
      %1830 = vsyncadd [#allocation4], 0
      %s1831 = sshll.u32 [#allocation11], 4
      %s1832 = int_to_ptr.vmem [resolvable:$true] %s1831
      %s1833 = sshll.u32 %s7, 4
      %s1834 = int_to_ptr.hbm [resolvable:$true] %s1833
      %1839 = dma.vmem_to_hbm [thread:$0]  %s1832, 4096, %s1834, [#allocation4], 256, 256, 16
    $region53: #{tpu_custom_call.1} parent=1 // pred_fallthru
      _
    // Predicated region
    $region54: #{tpu_custom_call.1} parent=1 // pred_check
      _
    $region55: #{tpu_custom_call.1} parent=1 // pred_check_branch
      %1841 = sbr.rel (0) target = $region57
    $region56: #{tpu_custom_call.1} parent=1 // pred_region
      %1843 = dma.done [#allocation4], 4096
    $region57: #{tpu_custom_call.1} parent=1 // pred_fallthru
      _
    %1844 = vsyncpa [#allocation3], 1
    %1845 = vsyncpa [#allocation6], 1
    %1846 = vsyncpa [#allocation9], 1
    %1847 = vsyncpa [#allocation4], 1

</llo_original>
